<compile_context>
chip_gen: v5e
topology: v5e:2x2
jax: 0.10.0
libtpu: 0.0.40
codegen_flags: <defaults>
</compile_context>

<pallas_src>
import functools

import jax
import jax.numpy as jnp
from jax.experimental import pallas as pl
from jax.experimental.pallas import tpu as pltpu


def _round_up(n, m):
    return ((n + m - 1) // m) * m


def _conv3d_kernel(x_ref, m_ref, o_ref):
    # x_ref : (3, 3, BM, Kp)        per-(ds,dh) im2col taps, width+channels fused in lanes
    # m_ref : (3, 3, Kp, W*Cout)    width-band-folded conv weights (zero-padded on K)
    # o_ref : (BM, W*Cout)
    acc = jnp.zeros(o_ref.shape, jnp.float32)
    # Static 3x3 tap loop; each tap is read straight from the Ref (bounded live
    # ranges, no spill traffic) and is one lane-dense MXU matmul.
    for ds in range(3):
        for dh in range(3):
            acc = acc + jnp.dot(x_ref[ds, dh], m_ref[ds, dh],
                                preferred_element_type=jnp.float32)
    o_ref[...] = acc.astype(o_ref.dtype)


def fold_conv3d_weight(weight, W):
    """weight (Cout, Cin, 3, 3, 3) torch OIDHW -> band matrix (3, 3, Kp, W*Cout).

    M[ds, dh, wi*Cin+ci, wo*Cout+co] = weight[co, ci, ds, dh, wi-wo] when
    0 <= wi - wo <= 2, else 0, with Kp = round_up((W+2)*Cin, 128).
    Pure placement (gather + mask, no arithmetic) so it is bit-exact.
    Compute this ONCE per weight and reuse it every forward (hoisted fold).
    """
    Cout, Cin, kS, kH, kW = weight.shape
    Wp = W + 2
    K = Wp * Cin
    Kp = _round_up(K, 128)

    w_k = jnp.transpose(weight, (2, 3, 4, 1, 0))            # (kS, kH, kW, Cin, Cout)
    wi = jnp.arange(Wp)[:, None]                            # (Wp, 1)
    wo = jnp.arange(W)[None, :]                             # (1, W)
    dwi = wi - wo                                           # (Wp, W)
    valid = (dwi >= 0) & (dwi <= kW - 1)
    dwi_c = jnp.clip(dwi, 0, kW - 1)

    m = w_k[:, :, dwi_c, :, :]                              # (kS, kH, Wp, W, Cin, Cout)
    m = jnp.where(valid[None, None, :, :, None, None], m, jnp.zeros((), weight.dtype))
    m = jnp.transpose(m, (0, 1, 2, 4, 3, 5))                # (kS, kH, Wp, Cin, W, Cout)
    m = m.reshape(kS, kH, K, W * Cout)
    if Kp > K:
        m = jnp.pad(m, ((0, 0), (0, 0), (0, Kp - K), (0, 0)))
    return m


@functools.partial(jax.jit, static_argnames=("block_m",))
def basic_conv3d(x_ncshw, m_fold, *, block_m=128):
    """x_ncshw: (N, Cin, S, H, W); m_fold: fold_conv3d_weight(weight, W).  bias=False."""
    N, Cin, S, H, W = x_ncshw.shape
    K = (W + 2) * Cin
    Kp = m_fold.shape[2]
    NCout = m_fold.shape[3]            # = W * Cout
    Cout = NCout // W

    # --- glue (plain JAX, layout plumbing only) ---
    x_cl = jnp.transpose(x_ncshw, (0, 2, 3, 4, 1))                    # (N, S, H, W, Cin)
    x_pad = jnp.pad(x_cl, ((0, 0), (1, 1), (1, 1), (1, 1), (0, 0)))   # (N, S+2, H+2, W+2, Cin)

    # im2col over the (depth, height) taps only; width + channels stay fused in lanes.
    M = N * S * H                                                     # batch folded into matmul M
    taps = [x_pad[:, ds:ds + S, dh:dh + H, :, :].reshape(M, K)
            for ds in range(3) for dh in range(3)]
    x_taps = jnp.stack(taps, 0).reshape(3, 3, M, K)

    # Pad contraction lanes K -> Kp (dense vreg loads) and M rows to a block_m multiple.
    Mp = _round_up(M, block_m)
    x_taps = jnp.pad(x_taps, ((0, 0), (0, 0), (0, Mp - M), (0, Kp - K)))

    out2d = pl.pallas_call(
        _conv3d_kernel,
        out_shape=jax.ShapeDtypeStruct((Mp, NCout), x_ncshw.dtype),
        grid=(Mp // block_m,),
        in_specs=[
            pl.BlockSpec((3, 3, block_m, Kp), lambda i: (0, 0, i, 0)),
            # Constant weight block (block index never changes across the grid).
            # TODO(synk): at real channel counts, single-buffer this block
            # (pipeline_mode=pl.Buffered(1)) and/or add a Cout tile axis + set
            # vmem_limit_bytes so the working set fits v7x's 64 MiB VMEM.
            pl.BlockSpec((3, 3, Kp, NCout), lambda i: (0, 0, 0, 0)),
        ],
        out_specs=pl.BlockSpec((block_m, NCout), lambda i: (i, 0)),
        compiler_params=pltpu.CompilerParams(dimension_semantics=("parallel",)),
    )(x_taps, m_fold)

    # back to PyTorch layout: (N, Cout, S, H, W)
    out = out2d[:M].reshape(N, S, H, W, Cout)
    return jnp.transpose(out, (0, 4, 1, 2, 3))


def _reference(x_ncshw, weight):
    """Pure-JAX mirror of nn.Conv3d(k=3, stride=1, pad=1, bias=False)."""
    return jax.lax.conv_general_dilated(
        x_ncshw, weight,
        window_strides=(1, 1, 1),
        padding=((1, 1), (1, 1), (1, 1)),
        dimension_numbers=('NCDHW', 'OIDHW', 'NCDHW'))


if __name__ == "__main__":
    # BasicConv3d(in_channels=4, out_channels=8) on a small (n, c, s, h, w) input.
    in_channels, out_channels = 4, 8
    N, S, H, W = 2, 8, 16, 16

    key = jax.random.PRNGKey(0)
    k_x, k_w = jax.random.split(key, 2)
    x = jax.random.normal(k_x, (N, in_channels, S, H, W), dtype=jnp.float32)
    weight = 0.1 * jax.random.normal(
        k_w, (out_channels, in_channels, 3, 3, 3), dtype=jnp.float32)

    # One-time weight fold, hoisted out of the per-call path.
    m_fold = jax.block_until_ready(fold_conv3d_weight(weight, W))

    out = basic_conv3d(x, m_fold)
    out = jax.block_until_ready(out)

    ref = _reference(x, weight)
    assert out.shape == (N, out_channels, S, H, W), out.shape
    assert out.dtype == jnp.float32
    assert jnp.allclose(out, ref, rtol=1e-3, atol=1e-3), (
        float(jnp.max(jnp.abs(out - ref))))
    print("KERNEL_OK")
</pallas_src>

<mosaic_0001>
module attributes {stable_mosaic.version = 11 : i64} {
  func.func @_conv3d_kernel(%arg0: i32, %arg1: memref<3x3x128x128xf32, #tpu.memory_space<vmem>>, %arg2: memref<3x3x128x128xf32, #tpu.memory_space<vmem>>, %arg3: memref<128x128xf32, #tpu.memory_space<vmem>>) attributes {dimension_semantics = [#tpu.dimension_semantics<parallel>], iteration_bounds = array<i64: 2>, scalar_prefetch = 0 : i64, scratch_operands = 0 : i64, tpu.core_type = #tpu.core_type<tc>, window_params = [{transform_indices = @transform_0, window_bounds = array<i64: 3, 3, 128, 128>}, {pipeline_mode = #tpu.pipeline_mode<synchronous>, transform_indices = @transform_1, window_bounds = array<i64: 3, 3, 128, 128>}, {transform_indices = @transform_2, window_bounds = array<i64: 128, 128>}]} {
    %cst = arith.constant 0.000000e+00 : f32
    %0 = vector.broadcast %cst : f32 to vector<128x128xf32>
    %c0 = arith.constant 0 : index
    %c0_0 = arith.constant 0 : index
    %c0_1 = arith.constant 0 : index
    %c0_2 = arith.constant 0 : index
    %1 = vector.load %arg1[%c0, %c0_0, %c0_1, %c0_2] : memref<3x3x128x128xf32, #tpu.memory_space<vmem>>, vector<1x1x128x128xf32>
    %2 = vector.shape_cast %1 : vector<1x1x128x128xf32> to vector<128x128xf32>
    %c0_3 = arith.constant 0 : index
    %c0_4 = arith.constant 0 : index
    %c0_5 = arith.constant 0 : index
    %c0_6 = arith.constant 0 : index
    %3 = vector.load %arg2[%c0_3, %c0_4, %c0_5, %c0_6] : memref<3x3x128x128xf32, #tpu.memory_space<vmem>>, vector<1x1x128x128xf32>
    %4 = vector.shape_cast %3 : vector<1x1x128x128xf32> to vector<128x128xf32>
    %cst_7 = arith.constant dense<0.000000e+00> : vector<128x128xf32>
    %5 = tpu.matmul %2, %4, %cst_7 {dimension_numbers = #tpu.dot_dimension_numbers<[1], [0], [0], [1], [0, 0, 1, 1], [], []>} : vector<128x128xf32>, vector<128x128xf32>, vector<128x128xf32> -> vector<128x128xf32>
    %6 = arith.addf %0, %5 : vector<128x128xf32>
    %c0_8 = arith.constant 0 : index
    %c1 = arith.constant 1 : index
    %c0_9 = arith.constant 0 : index
    %c0_10 = arith.constant 0 : index
    %7 = vector.load %arg1[%c0_8, %c1, %c0_9, %c0_10] : memref<3x3x128x128xf32, #tpu.memory_space<vmem>>, vector<1x1x128x128xf32>
    %8 = vector.shape_cast %7 : vector<1x1x128x128xf32> to vector<128x128xf32>
    %c0_11 = arith.constant 0 : index
    %c1_12 = arith.constant 1 : index
    %c0_13 = arith.constant 0 : index
    %c0_14 = arith.constant 0 : index
    %9 = vector.load %arg2[%c0_11, %c1_12, %c0_13, %c0_14] : memref<3x3x128x128xf32, #tpu.memory_space<vmem>>, vector<1x1x128x128xf32>
    %10 = vector.shape_cast %9 : vector<1x1x128x128xf32> to vector<128x128xf32>
    %cst_15 = arith.constant dense<0.000000e+00> : vector<128x128xf32>
    %11 = tpu.matmul %8, %10, %cst_15 {dimension_numbers = #tpu.dot_dimension_numbers<[1], [0], [0], [1], [0, 0, 1, 1], [], []>} : vector<128x128xf32>, vector<128x128xf32>, vector<128x128xf32> -> vector<128x128xf32>
    %12 = arith.addf %6, %11 : vector<128x128xf32>
    %c0_16 = arith.constant 0 : index
    %c2 = arith.constant 2 : index
    %c0_17 = arith.constant 0 : index
    %c0_18 = arith.constant 0 : index
    %13 = vector.load %arg1[%c0_16, %c2, %c0_17, %c0_18] : memref<3x3x128x128xf32, #tpu.memory_space<vmem>>, vector<1x1x128x128xf32>
    %14 = vector.shape_cast %13 : vector<1x1x128x128xf32> to vector<128x128xf32>
    %c0_19 = arith.constant 0 : index
    %c2_20 = arith.constant 2 : index
    %c0_21 = arith.constant 0 : index
    %c0_22 = arith.constant 0 : index
    %15 = vector.load %arg2[%c0_19, %c2_20, %c0_21, %c0_22] : memref<3x3x128x128xf32, #tpu.memory_space<vmem>>, vector<1x1x128x128xf32>
    %16 = vector.shape_cast %15 : vector<1x1x128x128xf32> to vector<128x128xf32>
    %cst_23 = arith.constant dense<0.000000e+00> : vector<128x128xf32>
    %17 = tpu.matmul %14, %16, %cst_23 {dimension_numbers = #tpu.dot_dimension_numbers<[1], [0], [0], [1], [0, 0, 1, 1], [], []>} : vector<128x128xf32>, vector<128x128xf32>, vector<128x128xf32> -> vector<128x128xf32>
    %18 = arith.addf %12, %17 : vector<128x128xf32>
    %c1_24 = arith.constant 1 : index
    %c0_25 = arith.constant 0 : index
    %c0_26 = arith.constant 0 : index
    %c0_27 = arith.constant 0 : index
    %19 = vector.load %arg1[%c1_24, %c0_25, %c0_26, %c0_27] : memref<3x3x128x128xf32, #tpu.memory_space<vmem>>, vector<1x1x128x128xf32>
    %20 = vector.shape_cast %19 : vector<1x1x128x128xf32> to vector<128x128xf32>
    %c1_28 = arith.constant 1 : index
    %c0_29 = arith.constant 0 : index
    %c0_30 = arith.constant 0 : index
    %c0_31 = arith.constant 0 : index
    %21 = vector.load %arg2[%c1_28, %c0_29, %c0_30, %c0_31] : memref<3x3x128x128xf32, #tpu.memory_space<vmem>>, vector<1x1x128x128xf32>
    %22 = vector.shape_cast %21 : vector<1x1x128x128xf32> to vector<128x128xf32>
    %cst_32 = arith.constant dense<0.000000e+00> : vector<128x128xf32>
    %23 = tpu.matmul %20, %22, %cst_32 {dimension_numbers = #tpu.dot_dimension_numbers<[1], [0], [0], [1], [0, 0, 1, 1], [], []>} : vector<128x128xf32>, vector<128x128xf32>, vector<128x128xf32> -> vector<128x128xf32>
    %24 = arith.addf %18, %23 : vector<128x128xf32>
    %c1_33 = arith.constant 1 : index
    %c1_34 = arith.constant 1 : index
    %c0_35 = arith.constant 0 : index
    %c0_36 = arith.constant 0 : index
    %25 = vector.load %arg1[%c1_33, %c1_34, %c0_35, %c0_36] : memref<3x3x128x128xf32, #tpu.memory_space<vmem>>, vector<1x1x128x128xf32>
    %26 = vector.shape_cast %25 : vector<1x1x128x128xf32> to vector<128x128xf32>
    %c1_37 = arith.constant 1 : index
    %c1_38 = arith.constant 1 : index
    %c0_39 = arith.constant 0 : index
    %c0_40 = arith.constant 0 : index
    %27 = vector.load %arg2[%c1_37, %c1_38, %c0_39, %c0_40] : memref<3x3x128x128xf32, #tpu.memory_space<vmem>>, vector<1x1x128x128xf32>
    %28 = vector.shape_cast %27 : vector<1x1x128x128xf32> to vector<128x128xf32>
    %cst_41 = arith.constant dense<0.000000e+00> : vector<128x128xf32>
    %29 = tpu.matmul %26, %28, %cst_41 {dimension_numbers = #tpu.dot_dimension_numbers<[1], [0], [0], [1], [0, 0, 1, 1], [], []>} : vector<128x128xf32>, vector<128x128xf32>, vector<128x128xf32> -> vector<128x128xf32>
    %30 = arith.addf %24, %29 : vector<128x128xf32>
    %c1_42 = arith.constant 1 : index
    %c2_43 = arith.constant 2 : index
    %c0_44 = arith.constant 0 : index
    %c0_45 = arith.constant 0 : index
    %31 = vector.load %arg1[%c1_42, %c2_43, %c0_44, %c0_45] : memref<3x3x128x128xf32, #tpu.memory_space<vmem>>, vector<1x1x128x128xf32>
    %32 = vector.shape_cast %31 : vector<1x1x128x128xf32> to vector<128x128xf32>
    %c1_46 = arith.constant 1 : index
    %c2_47 = arith.constant 2 : index
    %c0_48 = arith.constant 0 : index
    %c0_49 = arith.constant 0 : index
    %33 = vector.load %arg2[%c1_46, %c2_47, %c0_48, %c0_49] : memref<3x3x128x128xf32, #tpu.memory_space<vmem>>, vector<1x1x128x128xf32>
    %34 = vector.shape_cast %33 : vector<1x1x128x128xf32> to vector<128x128xf32>
    %cst_50 = arith.constant dense<0.000000e+00> : vector<128x128xf32>
    %35 = tpu.matmul %32, %34, %cst_50 {dimension_numbers = #tpu.dot_dimension_numbers<[1], [0], [0], [1], [0, 0, 1, 1], [], []>} : vector<128x128xf32>, vector<128x128xf32>, vector<128x128xf32> -> vector<128x128xf32>
    %36 = arith.addf %30, %35 : vector<128x128xf32>
    %c2_51 = arith.constant 2 : index
    %c0_52 = arith.constant 0 : index
    %c0_53 = arith.constant 0 : index
    %c0_54 = arith.constant 0 : index
    %37 = vector.load %arg1[%c2_51, %c0_52, %c0_53, %c0_54] : memref<3x3x128x128xf32, #tpu.memory_space<vmem>>, vector<1x1x128x128xf32>
    %38 = vector.shape_cast %37 : vector<1x1x128x128xf32> to vector<128x128xf32>
    %c2_55 = arith.constant 2 : index
    %c0_56 = arith.constant 0 : index
    %c0_57 = arith.constant 0 : index
    %c0_58 = arith.constant 0 : index
    %39 = vector.load %arg2[%c2_55, %c0_56, %c0_57, %c0_58] : memref<3x3x128x128xf32, #tpu.memory_space<vmem>>, vector<1x1x128x128xf32>
    %40 = vector.shape_cast %39 : vector<1x1x128x128xf32> to vector<128x128xf32>
    %cst_59 = arith.constant dense<0.000000e+00> : vector<128x128xf32>
    %41 = tpu.matmul %38, %40, %cst_59 {dimension_numbers = #tpu.dot_dimension_numbers<[1], [0], [0], [1], [0, 0, 1, 1], [], []>} : vector<128x128xf32>, vector<128x128xf32>, vector<128x128xf32> -> vector<128x128xf32>
    %42 = arith.addf %36, %41 : vector<128x128xf32>
    %c2_60 = arith.constant 2 : index
    %c1_61 = arith.constant 1 : index
    %c0_62 = arith.constant 0 : index
    %c0_63 = arith.constant 0 : index
    %43 = vector.load %arg1[%c2_60, %c1_61, %c0_62, %c0_63] : memref<3x3x128x128xf32, #tpu.memory_space<vmem>>, vector<1x1x128x128xf32>
    %44 = vector.shape_cast %43 : vector<1x1x128x128xf32> to vector<128x128xf32>
    %c2_64 = arith.constant 2 : index
    %c1_65 = arith.constant 1 : index
    %c0_66 = arith.constant 0 : index
    %c0_67 = arith.constant 0 : index
    %45 = vector.load %arg2[%c2_64, %c1_65, %c0_66, %c0_67] : memref<3x3x128x128xf32, #tpu.memory_space<vmem>>, vector<1x1x128x128xf32>
    %46 = vector.shape_cast %45 : vector<1x1x128x128xf32> to vector<128x128xf32>
    %cst_68 = arith.constant dense<0.000000e+00> : vector<128x128xf32>
    %47 = tpu.matmul %44, %46, %cst_68 {dimension_numbers = #tpu.dot_dimension_numbers<[1], [0], [0], [1], [0, 0, 1, 1], [], []>} : vector<128x128xf32>, vector<128x128xf32>, vector<128x128xf32> -> vector<128x128xf32>
    %48 = arith.addf %42, %47 : vector<128x128xf32>
    %c2_69 = arith.constant 2 : index
    %c2_70 = arith.constant 2 : index
    %c0_71 = arith.constant 0 : index
    %c0_72 = arith.constant 0 : index
    %49 = vector.load %arg1[%c2_69, %c2_70, %c0_71, %c0_72] : memref<3x3x128x128xf32, #tpu.memory_space<vmem>>, vector<1x1x128x128xf32>
    %50 = vector.shape_cast %49 : vector<1x1x128x128xf32> to vector<128x128xf32>
    %c2_73 = arith.constant 2 : index
    %c2_74 = arith.constant 2 : index
    %c0_75 = arith.constant 0 : index
    %c0_76 = arith.constant 0 : index
    %51 = vector.load %arg2[%c2_73, %c2_74, %c0_75, %c0_76] : memref<3x3x128x128xf32, #tpu.memory_space<vmem>>, vector<1x1x128x128xf32>
    %52 = vector.shape_cast %51 : vector<1x1x128x128xf32> to vector<128x128xf32>
    %cst_77 = arith.constant dense<0.000000e+00> : vector<128x128xf32>
    %53 = tpu.matmul %50, %52, %cst_77 {dimension_numbers = #tpu.dot_dimension_numbers<[1], [0], [0], [1], [0, 0, 1, 1], [], []>} : vector<128x128xf32>, vector<128x128xf32>, vector<128x128xf32> -> vector<128x128xf32>
    %54 = arith.addf %48, %53 : vector<128x128xf32>
    %c0_78 = arith.constant 0 : index
    %c0_79 = arith.constant 0 : index
    %55 = vector.load %arg3[%c0_78, %c0_79] : memref<128x128xf32, #tpu.memory_space<vmem>>, vector<128x128xf32>
    tpu.vector_store %arg3[%c0_78, %c0_79], %54 {strides = array<i32>} : memref<128x128xf32, #tpu.memory_space<vmem>>, vector<128x128xf32>,
    return
  }
  func.func @transform_0(%arg0: i32) -> (i32, i32, i32, i32) {
    %c0_i32 = arith.constant 0 : i32
    %c0_i32_0 = arith.constant 0 : i32
    %c0_i32_1 = arith.constant 0 : i32
    %c0_i32_2 = arith.constant 0 : i32
    return %c0_i32, %c0_i32_0, %arg0, %c0_i32_1 : i32, i32, i32, i32
  }
  func.func @transform_1(%arg0: i32) -> (i32, i32, i32, i32) {
    %c0_i32 = arith.constant 0 : i32
    %c0_i32_0 = arith.constant 0 : i32
    %c0_i32_1 = arith.constant 0 : i32
    %c0_i32_2 = arith.constant 0 : i32
    %c0_i32_3 = arith.constant 0 : i32
    return %c0_i32, %c0_i32_0, %c0_i32_1, %c0_i32_2 : i32, i32, i32, i32
  }
  func.func @transform_2(%arg0: i32) -> (i32, i32) {
    %c0_i32 = arith.constant 0 : i32
    %c0_i32_0 = arith.constant 0 : i32
    return %arg0, %c0_i32 : i32, i32
  }
}

</mosaic_0001>

<llo_original>
// kernel: basic_conv3d.1
$region0: #{basic_conv3d.1}
  #allocation0 [shape = 'u32[]', space=smem, size = 0x4, offset = 0x4, fixed_abs, tag = 'smem constant byte address 0x4 - core index']
  #allocation1 [shape = 'u32[72,128]{1,0:T(1,128)}', space=vmem, size = 0x9000, scoped, tag = 'internal scratch']
  %s0 = inlined_call_operand.vmem [shape: f32[3,3,256,128], index: 0, kind: input, shape index: {}]
  %s1 = inlined_call_operand.vmem [shape: f32[3,3,128,128], index: 1, kind: input, shape index: {}]
  %s2 = inlined_call_operand.vmem [shape: f32[256,128], index: 2, kind: output, shape index: {}]
  %s3 = sld [smem:[#allocation0]]
  $region79: #{basic_conv3d.1} parent=0
    _
  %s5 = ssub.s32 1, %s3
  %s6 = scalar_select 0, %s5, %s3
  $region1: #{basic_conv3d.1} parent=0
    #allocation2 [shape = 'u8[1179648]{0}', space=vmem, size = 0x120000, scoped, tag = 'input window, operand 0']
    loop: start=0, step=1, limit=4
    $region2: #{basic_conv3d.1} parent=1 // loop_pre_header
      _
    $region3: #{basic_conv3d.1} parent=1 // loop_header
      %s8 = sphi 0, %s12
      %p9 = scmp.ge.s32.totalorder %s8, 4
      %s18 = sphi 0, %s20
      %s21 = sphi 0, %s18
      %s22 = sphi 0, %s21
      %s38 = sphi 0, %s22
      %s42 = sphi 0, %s42
      %s44 = sphi 0, %s42
      %s45 = sphi 0, %s44
      %s59 = sphi 0, %s45
      %s65 = sphi 0, %s67
      %s68 = sphi 0, %s65
      %s69 = sphi 0, %s68
      %s85 = sphi 0, %s69
    $region4: #{basic_conv3d.1} parent=1 // loop_header_branch
      %11 = sbr.rel (%p9) target = $region8
    $region5: #{basic_conv3d.1} parent=1 // loop_body
      %s13 = ssub.s32 %s8, 1
      %s14 = ssub.s32 %s8, 2
      %s15 = sadd.s32 %s8, 1
      %s16 = ssub.s32 %s8, %s15
      %p17 = scmp.eq.s32.totalorder %s16, 0
      %s19 = sadd.s32 %s18, 1
      %s20 = scalar_select %p17, %s18, %s19
      %p23 = pneg %p17
      %p24 = scmp.eq.s32.totalorder %s8, 1
      %p25 = por %p23, %p24
      %p26 = scmp.ne.s32.totalorder %s18, %s21
      %p27 = scmp.eq.s32.totalorder %s8, 0
      %p28 = por %p26, %p27
      %p29 = scmp.ne.s32.totalorder %s18, %s21
      %p30 = scmp.eq.s32.totalorder %s13, 1
      %p31 = por %p29, %p30
      %p32 = scmp.ne.s32.totalorder %s21, %s22
      %p33 = scmp.eq.s32.totalorder %s13, 0
      %p34 = por %p32, %p33
      %p35 = scmp.ne.s32.totalorder %s21, %s22
      %p36 = scmp.eq.s32.totalorder %s14, 1
      %p37 = por %p35, %p36
      %p39 = scmp.ne.s32.totalorder %s22, %s38
      %p40 = scmp.eq.s32.totalorder %s14, 0
      %p41 = por %p39, %p40
      %s43 = sadd.s32 %s42, 1
      %p46 = scmp.eq.s32.totalorder %s8, 1
      %p47 = scmp.ne.s32.totalorder %s42, %s44
      %p48 = scmp.eq.s32.totalorder %s8, 0
      %p49 = por %p47, %p48
      %p50 = scmp.ne.s32.totalorder %s42, %s44
      %p51 = scmp.eq.s32.totalorder %s13, 1
      %p52 = por %p50, %p51
      %p53 = scmp.ne.s32.totalorder %s44, %s45
      %p54 = scmp.eq.s32.totalorder %s13, 0
      %p55 = por %p53, %p54
      %p56 = scmp.ne.s32.totalorder %s44, %s45
      %p57 = scmp.eq.s32.totalorder %s14, 1
      %p58 = por %p56, %p57
      %p60 = scmp.ne.s32.totalorder %s45, %s59
      %p61 = scmp.eq.s32.totalorder %s14, 0
      %p62 = por %p60, %p61
      %s63 = ssub.s32 %s8, %s15
      %p64 = scmp.eq.s32.totalorder %s63, 0
      %s66 = sadd.s32 %s65, 1
      %s67 = scalar_select %p64, %s65, %s66
      %p70 = pneg %p64
      %p71 = scmp.eq.s32.totalorder %s8, 1
      %p72 = por %p70, %p71
      %p73 = scmp.ne.s32.totalorder %s65, %s68
      %p74 = scmp.eq.s32.totalorder %s8, 0
      %p75 = por %p73, %p74
      %p76 = scmp.ne.s32.totalorder %s65, %s68
      %p77 = scmp.eq.s32.totalorder %s13, 1
      %p78 = por %p76, %p77
      %p79 = scmp.ne.s32.totalorder %s68, %s69
      %p80 = scmp.eq.s32.totalorder %s13, 0
      %p81 = por %p79, %p80
      %p82 = scmp.ne.s32.totalorder %s68, %s69
      %p83 = scmp.eq.s32.totalorder %s14, 1
      %p84 = por %p82, %p83
      %p86 = scmp.ne.s32.totalorder %s69, %s85
      %p87 = scmp.eq.s32.totalorder %s14, 0
      %p88 = por %p86, %p87
      %p89 = scmp.le.s32.totalorder 1, %s8
      %p90 = scmp.lt.s32.totalorder %s8, 3
      %p91 = pnand %p89, %p90
      %p92 = pneg %p91
      // Predicated region
      $region9: #{basic_conv3d.1} parent=5 // pred_check
        _
      $region10: #{basic_conv3d.1} parent=5 // pred_check_branch
        %94 = sbr.rel (%p91) target = $region12
      $region11: #{basic_conv3d.1} parent=5 // pred_region
        %s95 = ssub.s32 %s8, 1
        // Predicated region
        $region13: #{basic_conv3d.1} parent=11 // pred_check
          %p96 = pneg %p55
        $region14: #{basic_conv3d.1} parent=11 // pred_check_branch
          %98 = sbr.rel (%p96) target = $region16
        $region15: #{basic_conv3d.1} parent=11 // pred_region
          _
        $region16: #{basic_conv3d.1} parent=11 // pred_fallthru
          _
      $region12: #{basic_conv3d.1} parent=5 // pred_fallthru
        _
      %p99 = scmp.lt.s32.totalorder %s8, 2
      // Predicated region
      $region17: #{basic_conv3d.1} parent=5 // pred_check
        %p100 = pneg %p99
      $region18: #{basic_conv3d.1} parent=5 // pred_check_branch
        %102 = sbr.rel (%p100) target = $region20
      $region19: #{basic_conv3d.1} parent=5 // pred_region
        // Predicated region
        $region21: #{basic_conv3d.1} parent=19 // pred_check
          %p103 = pneg %p28
        $region22: #{basic_conv3d.1} parent=19 // pred_check_branch
          %105 = sbr.rel (%p103) target = $region24
        $region23: #{basic_conv3d.1} parent=19 // pred_region
          %s106 = sand.u32 %s18, 1
          %s107 = sand.u32 %s18, 1
          %s108 = smul.addr %s107, 1152
          %s109 = scalar_lea.vmem [#allocation2], %s108
          %s110 = smul.u32 16, %s8
          %s111 = smul.addr %s110, 8
          %s112 = scalar_lea.vmem %s0, %s111
          // Predicated region
          $region25: #{basic_conv3d.1} parent=23 // pred_check
            _
          $region26: #{basic_conv3d.1} parent=23 // pred_check_branch
            %114 = sbr.rel (0) target = $region28
          $region27: #{basic_conv3d.1} parent=23 // pred_region
            // Predicated region
            $region29: #{basic_conv3d.1} parent=27 // pred_check
              _
            $region30: #{basic_conv3d.1} parent=27 // pred_check_branch
              %116 = sbr.rel (0) target = $region32
            $region31: #{basic_conv3d.1} parent=27 // pred_region
              // Predicated region
              $region44: #{basic_conv3d.1} parent=31 // pred_check
                _
              $region45: #{basic_conv3d.1} parent=31 // pred_check_branch
                %418 = sbr.rel (0) target = $region47
              $region46: #{basic_conv3d.1} parent=31 // pred_region
                loop: start=0, step=1, limit=1
                $region48: #{basic_conv3d.1} parent=46 // loop_pre_header
                  _
                $region49: #{basic_conv3d.1} parent=46 // loop_header
                  %s420 = sphi 0, %s424
                  %p421 = scmp.ge.s32.totalorder %s420, 1
                  %s425 = sphi %s112, %s112
                  %s426 = sphi %s109, %s109
                $region50: #{basic_conv3d.1} parent=46 // loop_header_branch
                  %423 = sbr.rel (%p421) target = $region54
                $region51: #{basic_conv3d.1} parent=46 // loop_body
                  %v427 = vld [vmem:[%s425] sm:$0xff]
                  %428 = vst [vmem:[%s426] sm:$0xff] %v427
                  %v429 = vld [vmem:[%s425 + $0x8] sm:$0xff]
                  %430 = vst [vmem:[%s426 + $0x8] sm:$0xff] %v429
                  %v431 = vld [vmem:[%s425 + $0x10] sm:$0xff]
                  %432 = vst [vmem:[%s426 + $0x10] sm:$0xff] %v431
                  %v433 = vld [vmem:[%s425 + $0x18] sm:$0xff]
                  %434 = vst [vmem:[%s426 + $0x18] sm:$0xff] %v433
                  %v435 = vld [vmem:[%s425 + $0x20] sm:$0xff]
                  %436 = vst [vmem:[%s426 + $0x20] sm:$0xff] %v435
                  %v437 = vld [vmem:[%s425 + $0x28] sm:$0xff]
                  %438 = vst [vmem:[%s426 + $0x28] sm:$0xff] %v437
                  %v439 = vld [vmem:[%s425 + $0x30] sm:$0xff]
                  %440 = vst [vmem:[%s426 + $0x30] sm:$0xff] %v439
                  %v441 = vld [vmem:[%s425 + $0x38] sm:$0xff]
                  %442 = vst [vmem:[%s426 + $0x38] sm:$0xff] %v441
                  %v443 = vld [vmem:[%s425 + $0x40] sm:$0xff]
                  %444 = vst [vmem:[%s426 + $0x40] sm:$0xff] %v443
                  %v445 = vld [vmem:[%s425 + $0x48] sm:$0xff]
                  %446 = vst [vmem:[%s426 + $0x48] sm:$0xff] %v445
                  %v447 = vld [vmem:[%s425 + $0x50] sm:$0xff]
                  %448 = vst [vmem:[%s426 + $0x50] sm:$0xff] %v447
                  %v449 = vld [vmem:[%s425 + $0x58] sm:$0xff]
                  %450 = vst [vmem:[%s426 + $0x58] sm:$0xff] %v449
                  %v451 = vld [vmem:[%s425 + $0x60] sm:$0xff]
                  %452 = vst [vmem:[%s426 + $0x60] sm:$0xff] %v451
                  %v453 = vld [vmem:[%s425 + $0x68] sm:$0xff]
                  %454 = vst [vmem:[%s426 + $0x68] sm:$0xff] %v453
                  %v455 = vld [vmem:[%s425 + $0x70] sm:$0xff]
                  %456 = vst [vmem:[%s426 + $0x70] sm:$0xff] %v455
                  %v457 = vld [vmem:[%s425 + $0x78] sm:$0xff]
                  %458 = vst [vmem:[%s426 + $0x78] sm:$0xff] %v457
                  %v459 = vld [vmem:[%s425 + $0x100] sm:$0xff]
                  %460 = vst [vmem:[%s426 + $0x80] sm:$0xff] %v459
                  %v461 = vld [vmem:[%s425 + $0x108] sm:$0xff]
                  %462 = vst [vmem:[%s426 + $0x88] sm:$0xff] %v461
                  %v463 = vld [vmem:[%s425 + $0x110] sm:$0xff]
                  %464 = vst [vmem:[%s426 + $0x90] sm:$0xff] %v463
                  %v465 = vld [vmem:[%s425 + $0x118] sm:$0xff]
                  %466 = vst [vmem:[%s426 + $0x98] sm:$0xff] %v465
                  %v467 = vld [vmem:[%s425 + $0x120] sm:$0xff]
                  %468 = vst [vmem:[%s426 + $0xa0] sm:$0xff] %v467
                  %v469 = vld [vmem:[%s425 + $0x128] sm:$0xff]
                  %470 = vst [vmem:[%s426 + $0xa8] sm:$0xff] %v469
                  %v471 = vld [vmem:[%s425 + $0x130] sm:$0xff]
                  %472 = vst [vmem:[%s426 + $0xb0] sm:$0xff] %v471
                  %v473 = vld [vmem:[%s425 + $0x138] sm:$0xff]
                  %474 = vst [vmem:[%s426 + $0xb8] sm:$0xff] %v473
                  %v475 = vld [vmem:[%s425 + $0x140] sm:$0xff]
                  %476 = vst [vmem:[%s426 + $0xc0] sm:$0xff] %v475
                  %v477 = vld [vmem:[%s425 + $0x148] sm:$0xff]
                  %478 = vst [vmem:[%s426 + $0xc8] sm:$0xff] %v477
                  %v479 = vld [vmem:[%s425 + $0x150] sm:$0xff]
                  %480 = vst [vmem:[%s426 + $0xd0] sm:$0xff] %v479
                  %v481 = vld [vmem:[%s425 + $0x158] sm:$0xff]
                  %482 = vst [vmem:[%s426 + $0xd8] sm:$0xff] %v481
                  %v483 = vld [vmem:[%s425 + $0x160] sm:$0xff]
                  %484 = vst [vmem:[%s426 + $0xe0] sm:$0xff] %v483
                  %v485 = vld [vmem:[%s425 + $0x168] sm:$0xff]
                  %486 = vst [vmem:[%s426 + $0xe8] sm:$0xff] %v485
                  %v487 = vld [vmem:[%s425 + $0x170] sm:$0xff]
                  %488 = vst [vmem:[%s426 + $0xf0] sm:$0xff] %v487
                  %v489 = vld [vmem:[%s425 + $0x178] sm:$0xff]
                  %490 = vst [vmem:[%s426 + $0xf8] sm:$0xff] %v489
                  %v491 = vld [vmem:[%s425 + $0x200] sm:$0xff]
                  %492 = vst [vmem:[%s426 + $0x100] sm:$0xff] %v491
                  %v493 = vld [vmem:[%s425 + $0x208] sm:$0xff]
                  %494 = vst [vmem:[%s426 + $0x108] sm:$0xff] %v493
                  %v495 = vld [vmem:[%s425 + $0x210] sm:$0xff]
                  %496 = vst [vmem:[%s426 + $0x110] sm:$0xff] %v495
                  %v497 = vld [vmem:[%s425 + $0x218] sm:$0xff]
                  %498 = vst [vmem:[%s426 + $0x118] sm:$0xff] %v497
                  %v499 = vld [vmem:[%s425 + $0x220] sm:$0xff]
                  %500 = vst [vmem:[%s426 + $0x120] sm:$0xff] %v499
                  %v501 = vld [vmem:[%s425 + $0x228] sm:$0xff]
                  %502 = vst [vmem:[%s426 + $0x128] sm:$0xff] %v501
                  %v503 = vld [vmem:[%s425 + $0x230] sm:$0xff]
                  %504 = vst [vmem:[%s426 + $0x130] sm:$0xff] %v503
                  %v505 = vld [vmem:[%s425 + $0x238] sm:$0xff]
                  %506 = vst [vmem:[%s426 + $0x138] sm:$0xff] %v505
                  %v507 = vld [vmem:[%s425 + $0x240] sm:$0xff]
                  %508 = vst [vmem:[%s426 + $0x140] sm:$0xff] %v507
                  %v509 = vld [vmem:[%s425 + $0x248] sm:$0xff]
                  %510 = vst [vmem:[%s426 + $0x148] sm:$0xff] %v509
                  %v511 = vld [vmem:[%s425 + $0x250] sm:$0xff]
                  %512 = vst [vmem:[%s426 + $0x150] sm:$0xff] %v511
                  %v513 = vld [vmem:[%s425 + $0x258] sm:$0xff]
                  %514 = vst [vmem:[%s426 + $0x158] sm:$0xff] %v513
                  %v515 = vld [vmem:[%s425 + $0x260] sm:$0xff]
                  %516 = vst [vmem:[%s426 + $0x160] sm:$0xff] %v515
                  %v517 = vld [vmem:[%s425 + $0x268] sm:$0xff]
                  %518 = vst [vmem:[%s426 + $0x168] sm:$0xff] %v517
                  %v519 = vld [vmem:[%s425 + $0x270] sm:$0xff]
                  %520 = vst [vmem:[%s426 + $0x170] sm:$0xff] %v519
                  %v521 = vld [vmem:[%s425 + $0x278] sm:$0xff]
                  %522 = vst [vmem:[%s426 + $0x178] sm:$0xff] %v521
                  %v523 = vld [vmem:[%s425 + $0x300] sm:$0xff]
                  %524 = vst [vmem:[%s426 + $0x180] sm:$0xff] %v523
                  %v525 = vld [vmem:[%s425 + $0x308] sm:$0xff]
                  %526 = vst [vmem:[%s426 + $0x188] sm:$0xff] %v525
                  %v527 = vld [vmem:[%s425 + $0x310] sm:$0xff]
                  %528 = vst [vmem:[%s426 + $0x190] sm:$0xff] %v527
                  %v529 = vld [vmem:[%s425 + $0x318] sm:$0xff]
                  %530 = vst [vmem:[%s426 + $0x198] sm:$0xff] %v529
                  %v531 = vld [vmem:[%s425 + $0x320] sm:$0xff]
                  %532 = vst [vmem:[%s426 + $0x1a0] sm:$0xff] %v531
                  %v533 = vld [vmem:[%s425 + $0x328] sm:$0xff]
                  %534 = vst [vmem:[%s426 + $0x1a8] sm:$0xff] %v533
                  %v535 = vld [vmem:[%s425 + $0x330] sm:$0xff]
                  %536 = vst [vmem:[%s426 + $0x1b0] sm:$0xff] %v535
                  %v537 = vld [vmem:[%s425 + $0x338] sm:$0xff]
                  %538 = vst [vmem:[%s426 + $0x1b8] sm:$0xff] %v537
                  %v539 = vld [vmem:[%s425 + $0x340] sm:$0xff]
                  %540 = vst [vmem:[%s426 + $0x1c0] sm:$0xff] %v539
                  %v541 = vld [vmem:[%s425 + $0x348] sm:$0xff]
                  %542 = vst [vmem:[%s426 + $0x1c8] sm:$0xff] %v541
                  %v543 = vld [vmem:[%s425 + $0x350] sm:$0xff]
                  %544 = vst [vmem:[%s426 + $0x1d0] sm:$0xff] %v543
                  %v545 = vld [vmem:[%s425 + $0x358] sm:$0xff]
                  %546 = vst [vmem:[%s426 + $0x1d8] sm:$0xff] %v545
                  %v547 = vld [vmem:[%s425 + $0x360] sm:$0xff]
                  %548 = vst [vmem:[%s426 + $0x1e0] sm:$0xff] %v547
                  %v549 = vld [vmem:[%s425 + $0x368] sm:$0xff]
                  %550 = vst [vmem:[%s426 + $0x1e8] sm:$0xff] %v549
                  %v551 = vld [vmem:[%s425 + $0x370] sm:$0xff]
                  %552 = vst [vmem:[%s426 + $0x1f0] sm:$0xff] %v551
                  %v553 = vld [vmem:[%s425 + $0x378] sm:$0xff]
                  %554 = vst [vmem:[%s426 + $0x1f8] sm:$0xff] %v553
                  %v555 = vld [vmem:[%s425 + $0x400] sm:$0xff]
                  %556 = vst [vmem:[%s426 + $0x200] sm:$0xff] %v555
                  %v557 = vld [vmem:[%s425 + $0x408] sm:$0xff]
                  %558 = vst [vmem:[%s426 + $0x208] sm:$0xff] %v557
                  %v559 = vld [vmem:[%s425 + $0x410] sm:$0xff]
                  %560 = vst [vmem:[%s426 + $0x210] sm:$0xff] %v559
                  %v561 = vld [vmem:[%s425 + $0x418] sm:$0xff]
                  %562 = vst [vmem:[%s426 + $0x218] sm:$0xff] %v561
                  %v563 = vld [vmem:[%s425 + $0x420] sm:$0xff]
                  %564 = vst [vmem:[%s426 + $0x220] sm:$0xff] %v563
                  %v565 = vld [vmem:[%s425 + $0x428] sm:$0xff]
                  %566 = vst [vmem:[%s426 + $0x228] sm:$0xff] %v565
                  %v567 = vld [vmem:[%s425 + $0x430] sm:$0xff]
                  %568 = vst [vmem:[%s426 + $0x230] sm:$0xff] %v567
                  %v569 = vld [vmem:[%s425 + $0x438] sm:$0xff]
                  %570 = vst [vmem:[%s426 + $0x238] sm:$0xff] %v569
                  %v571 = vld [vmem:[%s425 + $0x440] sm:$0xff]
                  %572 = vst [vmem:[%s426 + $0x240] sm:$0xff] %v571
                  %v573 = vld [vmem:[%s425 + $0x448] sm:$0xff]
                  %574 = vst [vmem:[%s426 + $0x248] sm:$0xff] %v573
                  %v575 = vld [vmem:[%s425 + $0x450] sm:$0xff]
                  %576 = vst [vmem:[%s426 + $0x250] sm:$0xff] %v575
                  %v577 = vld [vmem:[%s425 + $0x458] sm:$0xff]
                  %578 = vst [vmem:[%s426 + $0x258] sm:$0xff] %v577
                  %v579 = vld [vmem:[%s425 + $0x460] sm:$0xff]
                  %580 = vst [vmem:[%s426 + $0x260] sm:$0xff] %v579
                  %v581 = vld [vmem:[%s425 + $0x468] sm:$0xff]
                  %582 = vst [vmem:[%s426 + $0x268] sm:$0xff] %v581
                  %v583 = vld [vmem:[%s425 + $0x470] sm:$0xff]
                  %584 = vst [vmem:[%s426 + $0x270] sm:$0xff] %v583
                  %v585 = vld [vmem:[%s425 + $0x478] sm:$0xff]
                  %586 = vst [vmem:[%s426 + $0x278] sm:$0xff] %v585
                  %v587 = vld [vmem:[%s425 + $0x500] sm:$0xff]
                  %588 = vst [vmem:[%s426 + $0x280] sm:$0xff] %v587
                  %v589 = vld [vmem:[%s425 + $0x508] sm:$0xff]
                  %590 = vst [vmem:[%s426 + $0x288] sm:$0xff] %v589
                  %v591 = vld [vmem:[%s425 + $0x510] sm:$0xff]
                  %592 = vst [vmem:[%s426 + $0x290] sm:$0xff] %v591
                  %v593 = vld [vmem:[%s425 + $0x518] sm:$0xff]
                  %594 = vst [vmem:[%s426 + $0x298] sm:$0xff] %v593
                  %v595 = vld [vmem:[%s425 + $0x520] sm:$0xff]
                  %596 = vst [vmem:[%s426 + $0x2a0] sm:$0xff] %v595
                  %v597 = vld [vmem:[%s425 + $0x528] sm:$0xff]
                  %598 = vst [vmem:[%s426 + $0x2a8] sm:$0xff] %v597
                  %v599 = vld [vmem:[%s425 + $0x530] sm:$0xff]
                  %600 = vst [vmem:[%s426 + $0x2b0] sm:$0xff] %v599
                  %v601 = vld [vmem:[%s425 + $0x538] sm:$0xff]
                  %602 = vst [vmem:[%s426 + $0x2b8] sm:$0xff] %v601
                  %v603 = vld [vmem:[%s425 + $0x540] sm:$0xff]
                  %604 = vst [vmem:[%s426 + $0x2c0] sm:$0xff] %v603
                  %v605 = vld [vmem:[%s425 + $0x548] sm:$0xff]
                  %606 = vst [vmem:[%s426 + $0x2c8] sm:$0xff] %v605
                  %v607 = vld [vmem:[%s425 + $0x550] sm:$0xff]
                  %608 = vst [vmem:[%s426 + $0x2d0] sm:$0xff] %v607
                  %v609 = vld [vmem:[%s425 + $0x558] sm:$0xff]
                  %610 = vst [vmem:[%s426 + $0x2d8] sm:$0xff] %v609
                  %v611 = vld [vmem:[%s425 + $0x560] sm:$0xff]
                  %612 = vst [vmem:[%s426 + $0x2e0] sm:$0xff] %v611
                  %v613 = vld [vmem:[%s425 + $0x568] sm:$0xff]
                  %614 = vst [vmem:[%s426 + $0x2e8] sm:$0xff] %v613
                  %v615 = vld [vmem:[%s425 + $0x570] sm:$0xff]
                  %616 = vst [vmem:[%s426 + $0x2f0] sm:$0xff] %v615
                  %v617 = vld [vmem:[%s425 + $0x578] sm:$0xff]
                  %618 = vst [vmem:[%s426 + $0x2f8] sm:$0xff] %v617
                  %v619 = vld [vmem:[%s425 + $0x600] sm:$0xff]
                  %620 = vst [vmem:[%s426 + $0x300] sm:$0xff] %v619
                  %v621 = vld [vmem:[%s425 + $0x608] sm:$0xff]
                  %622 = vst [vmem:[%s426 + $0x308] sm:$0xff] %v621
                  %v623 = vld [vmem:[%s425 + $0x610] sm:$0xff]
                  %624 = vst [vmem:[%s426 + $0x310] sm:$0xff] %v623
                  %v625 = vld [vmem:[%s425 + $0x618] sm:$0xff]
                  %626 = vst [vmem:[%s426 + $0x318] sm:$0xff] %v625
                  %v627 = vld [vmem:[%s425 + $0x620] sm:$0xff]
                  %628 = vst [vmem:[%s426 + $0x320] sm:$0xff] %v627
                  %v629 = vld [vmem:[%s425 + $0x628] sm:$0xff]
                  %630 = vst [vmem:[%s426 + $0x328] sm:$0xff] %v629
                  %v631 = vld [vmem:[%s425 + $0x630] sm:$0xff]
                  %632 = vst [vmem:[%s426 + $0x330] sm:$0xff] %v631
                  %v633 = vld [vmem:[%s425 + $0x638] sm:$0xff]
                  %634 = vst [vmem:[%s426 + $0x338] sm:$0xff] %v633
                  %v635 = vld [vmem:[%s425 + $0x640] sm:$0xff]
                  %636 = vst [vmem:[%s426 + $0x340] sm:$0xff] %v635
                  %v637 = vld [vmem:[%s425 + $0x648] sm:$0xff]
                  %638 = vst [vmem:[%s426 + $0x348] sm:$0xff] %v637
                  %v639 = vld [vmem:[%s425 + $0x650] sm:$0xff]
                  %640 = vst [vmem:[%s426 + $0x350] sm:$0xff] %v639
                  %v641 = vld [vmem:[%s425 + $0x658] sm:$0xff]
                  %642 = vst [vmem:[%s426 + $0x358] sm:$0xff] %v641
                  %v643 = vld [vmem:[%s425 + $0x660] sm:$0xff]
                  %644 = vst [vmem:[%s426 + $0x360] sm:$0xff] %v643
                  %v645 = vld [vmem:[%s425 + $0x668] sm:$0xff]
                  %646 = vst [vmem:[%s426 + $0x368] sm:$0xff] %v645
                  %v647 = vld [vmem:[%s425 + $0x670] sm:$0xff]
                  %648 = vst [vmem:[%s426 + $0x370] sm:$0xff] %v647
                  %v649 = vld [vmem:[%s425 + $0x678] sm:$0xff]
                  %650 = vst [vmem:[%s426 + $0x378] sm:$0xff] %v649
                  %v651 = vld [vmem:[%s425 + $0x700] sm:$0xff]
                  %652 = vst [vmem:[%s426 + $0x380] sm:$0xff] %v651
                  %v653 = vld [vmem:[%s425 + $0x708] sm:$0xff]
                  %654 = vst [vmem:[%s426 + $0x388] sm:$0xff] %v653
                  %v655 = vld [vmem:[%s425 + $0x710] sm:$0xff]
                  %656 = vst [vmem:[%s426 + $0x390] sm:$0xff] %v655
                  %v657 = vld [vmem:[%s425 + $0x718] sm:$0xff]
                  %658 = vst [vmem:[%s426 + $0x398] sm:$0xff] %v657
                  %v659 = vld [vmem:[%s425 + $0x720] sm:$0xff]
                  %660 = vst [vmem:[%s426 + $0x3a0] sm:$0xff] %v659
                  %v661 = vld [vmem:[%s425 + $0x728] sm:$0xff]
                  %662 = vst [vmem:[%s426 + $0x3a8] sm:$0xff] %v661
                  %v663 = vld [vmem:[%s425 + $0x730] sm:$0xff]
                  %664 = vst [vmem:[%s426 + $0x3b0] sm:$0xff] %v663
                  %v665 = vld [vmem:[%s425 + $0x738] sm:$0xff]
                  %666 = vst [vmem:[%s426 + $0x3b8] sm:$0xff] %v665
                  %v667 = vld [vmem:[%s425 + $0x740] sm:$0xff]
                  %668 = vst [vmem:[%s426 + $0x3c0] sm:$0xff] %v667
                  %v669 = vld [vmem:[%s425 + $0x748] sm:$0xff]
                  %670 = vst [vmem:[%s426 + $0x3c8] sm:$0xff] %v669
                  %v671 = vld [vmem:[%s425 + $0x750] sm:$0xff]
                  %672 = vst [vmem:[%s426 + $0x3d0] sm:$0xff] %v671
                  %v673 = vld [vmem:[%s425 + $0x758] sm:$0xff]
                  %674 = vst [vmem:[%s426 + $0x3d8] sm:$0xff] %v673
                  %v675 = vld [vmem:[%s425 + $0x760] sm:$0xff]
                  %676 = vst [vmem:[%s426 + $0x3e0] sm:$0xff] %v675
                  %v677 = vld [vmem:[%s425 + $0x768] sm:$0xff]
                  %678 = vst [vmem:[%s426 + $0x3e8] sm:$0xff] %v677
                  %v679 = vld [vmem:[%s425 + $0x770] sm:$0xff]
                  %680 = vst [vmem:[%s426 + $0x3f0] sm:$0xff] %v679
                  %v681 = vld [vmem:[%s425 + $0x778] sm:$0xff]
                  %682 = vst [vmem:[%s426 + $0x3f8] sm:$0xff] %v681
                  %v683 = vld [vmem:[%s425 + $0x800] sm:$0xff]
                  %684 = vst [vmem:[%s426 + $0x400] sm:$0xff] %v683
                  %v685 = vld [vmem:[%s425 + $0x808] sm:$0xff]
                  %686 = vst [vmem:[%s426 + $0x408] sm:$0xff] %v685
                  %v687 = vld [vmem:[%s425 + $0x810] sm:$0xff]
                  %688 = vst [vmem:[%s426 + $0x410] sm:$0xff] %v687
                  %v689 = vld [vmem:[%s425 + $0x818] sm:$0xff]
                  %690 = vst [vmem:[%s426 + $0x418] sm:$0xff] %v689
                  %v691 = vld [vmem:[%s425 + $0x820] sm:$0xff]
                  %692 = vst [vmem:[%s426 + $0x420] sm:$0xff] %v691
                  %v693 = vld [vmem:[%s425 + $0x828] sm:$0xff]
                  %694 = vst [vmem:[%s426 + $0x428] sm:$0xff] %v693
                  %v695 = vld [vmem:[%s425 + $0x830] sm:$0xff]
                  %696 = vst [vmem:[%s426 + $0x430] sm:$0xff] %v695
                  %v697 = vld [vmem:[%s425 + $0x838] sm:$0xff]
                  %698 = vst [vmem:[%s426 + $0x438] sm:$0xff] %v697
                  %v699 = vld [vmem:[%s425 + $0x840] sm:$0xff]
                  %700 = vst [vmem:[%s426 + $0x440] sm:$0xff] %v699
                  %v701 = vld [vmem:[%s425 + $0x848] sm:$0xff]
                  %702 = vst [vmem:[%s426 + $0x448] sm:$0xff] %v701
                  %v703 = vld [vmem:[%s425 + $0x850] sm:$0xff]
                  %704 = vst [vmem:[%s426 + $0x450] sm:$0xff] %v703
                  %v705 = vld [vmem:[%s425 + $0x858] sm:$0xff]
                  %706 = vst [vmem:[%s426 + $0x458] sm:$0xff] %v705
                  %v707 = vld [vmem:[%s425 + $0x860] sm:$0xff]
                  %708 = vst [vmem:[%s426 + $0x460] sm:$0xff] %v707
                  %v709 = vld [vmem:[%s425 + $0x868] sm:$0xff]
                  %710 = vst [vmem:[%s426 + $0x468] sm:$0xff] %v709
                  %v711 = vld [vmem:[%s425 + $0x870] sm:$0xff]
                  %712 = vst [vmem:[%s426 + $0x470] sm:$0xff] %v711
                  %v713 = vld [vmem:[%s425 + $0x878] sm:$0xff]
                  %714 = vst [vmem:[%s426 + $0x478] sm:$0xff] %v713
                $region52: #{basic_conv3d.1} parent=46 // loop_footer
                  %s424 = sadd.s32 1, %s420
                $region53: #{basic_conv3d.1} parent=46 // loop_footer_branch
                  %419 = sbr.rel target = $region49
                $region54: #{basic_conv3d.1} parent=46 // loop_exit
                  _
              $region47: #{basic_conv3d.1} parent=31 // pred_fallthru
                _
              // Predicated region
              $region55: #{basic_conv3d.1} parent=31 // pred_check
                _
              $region56: #{basic_conv3d.1} parent=31 // pred_check_branch
                %716 = sbr.rel target = $region58
              $region57: #{basic_conv3d.1} parent=31 // pred_region
                _
              $region58: #{basic_conv3d.1} parent=31 // pred_fallthru
                _
            $region32: #{basic_conv3d.1} parent=27 // pred_fallthru
              _
            // Predicated region
            $region33: #{basic_conv3d.1} parent=27 // pred_check
              _
            $region34: #{basic_conv3d.1} parent=27 // pred_check_branch
              %118 = sbr.rel target = $region36
            $region35: #{basic_conv3d.1} parent=27 // pred_region
              %s120 = ssub.s32 256, 1
              loop: start=0, step=1, limit=1
              $region37: #{basic_conv3d.1} parent=35 // loop_pre_header
                _
              $region38: #{basic_conv3d.1} parent=35 // loop_header
                %s122 = sphi 0, %s126
                %p123 = scmp.ge.s32.totalorder %s122, 1
                %s127 = sphi %s112, %s112
                %s128 = sphi %s109, %s109
              $region39: #{basic_conv3d.1} parent=35 // loop_header_branch
                %125 = sbr.rel (%p123) target = $region43
              $region40: #{basic_conv3d.1} parent=35 // loop_body
                %v129 = vld [vmem:[%s127] sm:%s120]
                %130 = vst [vmem:[%s128] sm:%s120] %v129
                %v131 = vld [vmem:[%s127 + $0x8] sm:%s120]
                %132 = vst [vmem:[%s128 + $0x8] sm:%s120] %v131
                %v133 = vld [vmem:[%s127 + $0x10] sm:%s120]
                %134 = vst [vmem:[%s128 + $0x10] sm:%s120] %v133
                %v135 = vld [vmem:[%s127 + $0x18] sm:%s120]
                %136 = vst [vmem:[%s128 + $0x18] sm:%s120] %v135
                %v137 = vld [vmem:[%s127 + $0x20] sm:%s120]
                %138 = vst [vmem:[%s128 + $0x20] sm:%s120] %v137
                %v139 = vld [vmem:[%s127 + $0x28] sm:%s120]
                %140 = vst [vmem:[%s128 + $0x28] sm:%s120] %v139
                %v141 = vld [vmem:[%s127 + $0x30] sm:%s120]
                %142 = vst [vmem:[%s128 + $0x30] sm:%s120] %v141
                %v143 = vld [vmem:[%s127 + $0x38] sm:%s120]
                %144 = vst [vmem:[%s128 + $0x38] sm:%s120] %v143
                %v145 = vld [vmem:[%s127 + $0x40] sm:%s120]
                %146 = vst [vmem:[%s128 + $0x40] sm:%s120] %v145
                %v147 = vld [vmem:[%s127 + $0x48] sm:%s120]
                %148 = vst [vmem:[%s128 + $0x48] sm:%s120] %v147
                %v149 = vld [vmem:[%s127 + $0x50] sm:%s120]
                %150 = vst [vmem:[%s128 + $0x50] sm:%s120] %v149
                %v151 = vld [vmem:[%s127 + $0x58] sm:%s120]
                %152 = vst [vmem:[%s128 + $0x58] sm:%s120] %v151
                %v153 = vld [vmem:[%s127 + $0x60] sm:%s120]
                %154 = vst [vmem:[%s128 + $0x60] sm:%s120] %v153
                %v155 = vld [vmem:[%s127 + $0x68] sm:%s120]
                %156 = vst [vmem:[%s128 + $0x68] sm:%s120] %v155
                %v157 = vld [vmem:[%s127 + $0x70] sm:%s120]
                %158 = vst [vmem:[%s128 + $0x70] sm:%s120] %v157
                %v159 = vld [vmem:[%s127 + $0x78] sm:%s120]
                %160 = vst [vmem:[%s128 + $0x78] sm:%s120] %v159
                %v161 = vld [vmem:[%s127 + $0x100] sm:%s120]
                %162 = vst [vmem:[%s128 + $0x80] sm:%s120] %v161
                %v163 = vld [vmem:[%s127 + $0x108] sm:%s120]
                %164 = vst [vmem:[%s128 + $0x88] sm:%s120] %v163
                %v165 = vld [vmem:[%s127 + $0x110] sm:%s120]
                %166 = vst [vmem:[%s128 + $0x90] sm:%s120] %v165
                %v167 = vld [vmem:[%s127 + $0x118] sm:%s120]
                %168 = vst [vmem:[%s128 + $0x98] sm:%s120] %v167
                %v169 = vld [vmem:[%s127 + $0x120] sm:%s120]
                %170 = vst [vmem:[%s128 + $0xa0] sm:%s120] %v169
                %v171 = vld [vmem:[%s127 + $0x128] sm:%s120]
                %172 = vst [vmem:[%s128 + $0xa8] sm:%s120] %v171
                %v173 = vld [vmem:[%s127 + $0x130] sm:%s120]
                %174 = vst [vmem:[%s128 + $0xb0] sm:%s120] %v173
                %v175 = vld [vmem:[%s127 + $0x138] sm:%s120]
                %176 = vst [vmem:[%s128 + $0xb8] sm:%s120] %v175
                %v177 = vld [vmem:[%s127 + $0x140] sm:%s120]
                %178 = vst [vmem:[%s128 + $0xc0] sm:%s120] %v177
                %v179 = vld [vmem:[%s127 + $0x148] sm:%s120]
                %180 = vst [vmem:[%s128 + $0xc8] sm:%s120] %v179
                %v181 = vld [vmem:[%s127 + $0x150] sm:%s120]
                %182 = vst [vmem:[%s128 + $0xd0] sm:%s120] %v181
                %v183 = vld [vmem:[%s127 + $0x158] sm:%s120]
                %184 = vst [vmem:[%s128 + $0xd8] sm:%s120] %v183
                %v185 = vld [vmem:[%s127 + $0x160] sm:%s120]
                %186 = vst [vmem:[%s128 + $0xe0] sm:%s120] %v185
                %v187 = vld [vmem:[%s127 + $0x168] sm:%s120]
                %188 = vst [vmem:[%s128 + $0xe8] sm:%s120] %v187
                %v189 = vld [vmem:[%s127 + $0x170] sm:%s120]
                %190 = vst [vmem:[%s128 + $0xf0] sm:%s120] %v189
                %v191 = vld [vmem:[%s127 + $0x178] sm:%s120]
                %192 = vst [vmem:[%s128 + $0xf8] sm:%s120] %v191
                %v193 = vld [vmem:[%s127 + $0x200] sm:%s120]
                %194 = vst [vmem:[%s128 + $0x100] sm:%s120] %v193
                %v195 = vld [vmem:[%s127 + $0x208] sm:%s120]
                %196 = vst [vmem:[%s128 + $0x108] sm:%s120] %v195
                %v197 = vld [vmem:[%s127 + $0x210] sm:%s120]
                %198 = vst [vmem:[%s128 + $0x110] sm:%s120] %v197
                %v199 = vld [vmem:[%s127 + $0x218] sm:%s120]
                %200 = vst [vmem:[%s128 + $0x118] sm:%s120] %v199
                %v201 = vld [vmem:[%s127 + $0x220] sm:%s120]
                %202 = vst [vmem:[%s128 + $0x120] sm:%s120] %v201
                %v203 = vld [vmem:[%s127 + $0x228] sm:%s120]
                %204 = vst [vmem:[%s128 + $0x128] sm:%s120] %v203
                %v205 = vld [vmem:[%s127 + $0x230] sm:%s120]
                %206 = vst [vmem:[%s128 + $0x130] sm:%s120] %v205
                %v207 = vld [vmem:[%s127 + $0x238] sm:%s120]
                %208 = vst [vmem:[%s128 + $0x138] sm:%s120] %v207
                %v209 = vld [vmem:[%s127 + $0x240] sm:%s120]
                %210 = vst [vmem:[%s128 + $0x140] sm:%s120] %v209
                %v211 = vld [vmem:[%s127 + $0x248] sm:%s120]
                %212 = vst [vmem:[%s128 + $0x148] sm:%s120] %v211
                %v213 = vld [vmem:[%s127 + $0x250] sm:%s120]
                %214 = vst [vmem:[%s128 + $0x150] sm:%s120] %v213
                %v215 = vld [vmem:[%s127 + $0x258] sm:%s120]
                %216 = vst [vmem:[%s128 + $0x158] sm:%s120] %v215
                %v217 = vld [vmem:[%s127 + $0x260] sm:%s120]
                %218 = vst [vmem:[%s128 + $0x160] sm:%s120] %v217
                %v219 = vld [vmem:[%s127 + $0x268] sm:%s120]
                %220 = vst [vmem:[%s128 + $0x168] sm:%s120] %v219
                %v221 = vld [vmem:[%s127 + $0x270] sm:%s120]
                %222 = vst [vmem:[%s128 + $0x170] sm:%s120] %v221
                %v223 = vld [vmem:[%s127 + $0x278] sm:%s120]
                %224 = vst [vmem:[%s128 + $0x178] sm:%s120] %v223
                %v225 = vld [vmem:[%s127 + $0x300] sm:%s120]
                %226 = vst [vmem:[%s128 + $0x180] sm:%s120] %v225
                %v227 = vld [vmem:[%s127 + $0x308] sm:%s120]
                %228 = vst [vmem:[%s128 + $0x188] sm:%s120] %v227
                %v229 = vld [vmem:[%s127 + $0x310] sm:%s120]
                %230 = vst [vmem:[%s128 + $0x190] sm:%s120] %v229
                %v231 = vld [vmem:[%s127 + $0x318] sm:%s120]
                %232 = vst [vmem:[%s128 + $0x198] sm:%s120] %v231
                %v233 = vld [vmem:[%s127 + $0x320] sm:%s120]
                %234 = vst [vmem:[%s128 + $0x1a0] sm:%s120] %v233
                %v235 = vld [vmem:[%s127 + $0x328] sm:%s120]
                %236 = vst [vmem:[%s128 + $0x1a8] sm:%s120] %v235
                %v237 = vld [vmem:[%s127 + $0x330] sm:%s120]
                %238 = vst [vmem:[%s128 + $0x1b0] sm:%s120] %v237
                %v239 = vld [vmem:[%s127 + $0x338] sm:%s120]
                %240 = vst [vmem:[%s128 + $0x1b8] sm:%s120] %v239
                %v241 = vld [vmem:[%s127 + $0x340] sm:%s120]
                %242 = vst [vmem:[%s128 + $0x1c0] sm:%s120] %v241
                %v243 = vld [vmem:[%s127 + $0x348] sm:%s120]
                %244 = vst [vmem:[%s128 + $0x1c8] sm:%s120] %v243
                %v245 = vld [vmem:[%s127 + $0x350] sm:%s120]
                %246 = vst [vmem:[%s128 + $0x1d0] sm:%s120] %v245
                %v247 = vld [vmem:[%s127 + $0x358] sm:%s120]
                %248 = vst [vmem:[%s128 + $0x1d8] sm:%s120] %v247
                %v249 = vld [vmem:[%s127 + $0x360] sm:%s120]
                %250 = vst [vmem:[%s128 + $0x1e0] sm:%s120] %v249
                %v251 = vld [vmem:[%s127 + $0x368] sm:%s120]
                %252 = vst [vmem:[%s128 + $0x1e8] sm:%s120] %v251
                %v253 = vld [vmem:[%s127 + $0x370] sm:%s120]
                %254 = vst [vmem:[%s128 + $0x1f0] sm:%s120] %v253
                %v255 = vld [vmem:[%s127 + $0x378] sm:%s120]
                %256 = vst [vmem:[%s128 + $0x1f8] sm:%s120] %v255
                %v257 = vld [vmem:[%s127 + $0x400] sm:%s120]
                %258 = vst [vmem:[%s128 + $0x200] sm:%s120] %v257
                %v259 = vld [vmem:[%s127 + $0x408] sm:%s120]
                %260 = vst [vmem:[%s128 + $0x208] sm:%s120] %v259
                %v261 = vld [vmem:[%s127 + $0x410] sm:%s120]
                %262 = vst [vmem:[%s128 + $0x210] sm:%s120] %v261
                %v263 = vld [vmem:[%s127 + $0x418] sm:%s120]
                %264 = vst [vmem:[%s128 + $0x218] sm:%s120] %v263
                %v265 = vld [vmem:[%s127 + $0x420] sm:%s120]
                %266 = vst [vmem:[%s128 + $0x220] sm:%s120] %v265
                %v267 = vld [vmem:[%s127 + $0x428] sm:%s120]
                %268 = vst [vmem:[%s128 + $0x228] sm:%s120] %v267
                %v269 = vld [vmem:[%s127 + $0x430] sm:%s120]
                %270 = vst [vmem:[%s128 + $0x230] sm:%s120] %v269
                %v271 = vld [vmem:[%s127 + $0x438] sm:%s120]
                %272 = vst [vmem:[%s128 + $0x238] sm:%s120] %v271
                %v273 = vld [vmem:[%s127 + $0x440] sm:%s120]
                %274 = vst [vmem:[%s128 + $0x240] sm:%s120] %v273
                %v275 = vld [vmem:[%s127 + $0x448] sm:%s120]
                %276 = vst [vmem:[%s128 + $0x248] sm:%s120] %v275
                %v277 = vld [vmem:[%s127 + $0x450] sm:%s120]
                %278 = vst [vmem:[%s128 + $0x250] sm:%s120] %v277
                %v279 = vld [vmem:[%s127 + $0x458] sm:%s120]
                %280 = vst [vmem:[%s128 + $0x258] sm:%s120] %v279
                %v281 = vld [vmem:[%s127 + $0x460] sm:%s120]
                %282 = vst [vmem:[%s128 + $0x260] sm:%s120] %v281
                %v283 = vld [vmem:[%s127 + $0x468] sm:%s120]
                %284 = vst [vmem:[%s128 + $0x268] sm:%s120] %v283
                %v285 = vld [vmem:[%s127 + $0x470] sm:%s120]
                %286 = vst [vmem:[%s128 + $0x270] sm:%s120] %v285
                %v287 = vld [vmem:[%s127 + $0x478] sm:%s120]
                %288 = vst [vmem:[%s128 + $0x278] sm:%s120] %v287
                %v289 = vld [vmem:[%s127 + $0x500] sm:%s120]
                %290 = vst [vmem:[%s128 + $0x280] sm:%s120] %v289
                %v291 = vld [vmem:[%s127 + $0x508] sm:%s120]
                %292 = vst [vmem:[%s128 + $0x288] sm:%s120] %v291
                %v293 = vld [vmem:[%s127 + $0x510] sm:%s120]
                %294 = vst [vmem:[%s128 + $0x290] sm:%s120] %v293
                %v295 = vld [vmem:[%s127 + $0x518] sm:%s120]
                %296 = vst [vmem:[%s128 + $0x298] sm:%s120] %v295
                %v297 = vld [vmem:[%s127 + $0x520] sm:%s120]
                %298 = vst [vmem:[%s128 + $0x2a0] sm:%s120] %v297
                %v299 = vld [vmem:[%s127 + $0x528] sm:%s120]
                %300 = vst [vmem:[%s128 + $0x2a8] sm:%s120] %v299
                %v301 = vld [vmem:[%s127 + $0x530] sm:%s120]
                %302 = vst [vmem:[%s128 + $0x2b0] sm:%s120] %v301
                %v303 = vld [vmem:[%s127 + $0x538] sm:%s120]
                %304 = vst [vmem:[%s128 + $0x2b8] sm:%s120] %v303
                %v305 = vld [vmem:[%s127 + $0x540] sm:%s120]
                %306 = vst [vmem:[%s128 + $0x2c0] sm:%s120] %v305
                %v307 = vld [vmem:[%s127 + $0x548] sm:%s120]
                %308 = vst [vmem:[%s128 + $0x2c8] sm:%s120] %v307
                %v309 = vld [vmem:[%s127 + $0x550] sm:%s120]
                %310 = vst [vmem:[%s128 + $0x2d0] sm:%s120] %v309
                %v311 = vld [vmem:[%s127 + $0x558] sm:%s120]
                %312 = vst [vmem:[%s128 + $0x2d8] sm:%s120] %v311
                %v313 = vld [vmem:[%s127 + $0x560] sm:%s120]
                %314 = vst [vmem:[%s128 + $0x2e0] sm:%s120] %v313
                %v315 = vld [vmem:[%s127 + $0x568] sm:%s120]
                %316 = vst [vmem:[%s128 + $0x2e8] sm:%s120] %v315
                %v317 = vld [vmem:[%s127 + $0x570] sm:%s120]
                %318 = vst [vmem:[%s128 + $0x2f0] sm:%s120] %v317
                %v319 = vld [vmem:[%s127 + $0x578] sm:%s120]
                %320 = vst [vmem:[%s128 + $0x2f8] sm:%s120] %v319
                %v321 = vld [vmem:[%s127 + $0x600] sm:%s120]
                %322 = vst [vmem:[%s128 + $0x300] sm:%s120] %v321
                %v323 = vld [vmem:[%s127 + $0x608] sm:%s120]
                %324 = vst [vmem:[%s128 + $0x308] sm:%s120] %v323
                %v325 = vld [vmem:[%s127 + $0x610] sm:%s120]
                %326 = vst [vmem:[%s128 + $0x310] sm:%s120] %v325
                %v327 = vld [vmem:[%s127 + $0x618] sm:%s120]
                %328 = vst [vmem:[%s128 + $0x318] sm:%s120] %v327
                %v329 = vld [vmem:[%s127 + $0x620] sm:%s120]
                %330 = vst [vmem:[%s128 + $0x320] sm:%s120] %v329
                %v331 = vld [vmem:[%s127 + $0x628] sm:%s120]
                %332 = vst [vmem:[%s128 + $0x328] sm:%s120] %v331
                %v333 = vld [vmem:[%s127 + $0x630] sm:%s120]
                %334 = vst [vmem:[%s128 + $0x330] sm:%s120] %v333
                %v335 = vld [vmem:[%s127 + $0x638] sm:%s120]
                %336 = vst [vmem:[%s128 + $0x338] sm:%s120] %v335
                %v337 = vld [vmem:[%s127 + $0x640] sm:%s120]
                %338 = vst [vmem:[%s128 + $0x340] sm:%s120] %v337
                %v339 = vld [vmem:[%s127 + $0x648] sm:%s120]
                %340 = vst [vmem:[%s128 + $0x348] sm:%s120] %v339
                %v341 = vld [vmem:[%s127 + $0x650] sm:%s120]
                %342 = vst [vmem:[%s128 + $0x350] sm:%s120] %v341
                %v343 = vld [vmem:[%s127 + $0x658] sm:%s120]
                %344 = vst [vmem:[%s128 + $0x358] sm:%s120] %v343
                %v345 = vld [vmem:[%s127 + $0x660] sm:%s120]
                %346 = vst [vmem:[%s128 + $0x360] sm:%s120] %v345
                %v347 = vld [vmem:[%s127 + $0x668] sm:%s120]
                %348 = vst [vmem:[%s128 + $0x368] sm:%s120] %v347
                %v349 = vld [vmem:[%s127 + $0x670] sm:%s120]
                %350 = vst [vmem:[%s128 + $0x370] sm:%s120] %v349
                %v351 = vld [vmem:[%s127 + $0x678] sm:%s120]
                %352 = vst [vmem:[%s128 + $0x378] sm:%s120] %v351
                %v353 = vld [vmem:[%s127 + $0x700] sm:%s120]
                %354 = vst [vmem:[%s128 + $0x380] sm:%s120] %v353
                %v355 = vld [vmem:[%s127 + $0x708] sm:%s120]
                %356 = vst [vmem:[%s128 + $0x388] sm:%s120] %v355
                %v357 = vld [vmem:[%s127 + $0x710] sm:%s120]
                %358 = vst [vmem:[%s128 + $0x390] sm:%s120] %v357
                %v359 = vld [vmem:[%s127 + $0x718] sm:%s120]
                %360 = vst [vmem:[%s128 + $0x398] sm:%s120] %v359
                %v361 = vld [vmem:[%s127 + $0x720] sm:%s120]
                %362 = vst [vmem:[%s128 + $0x3a0] sm:%s120] %v361
                %v363 = vld [vmem:[%s127 + $0x728] sm:%s120]
                %364 = vst [vmem:[%s128 + $0x3a8] sm:%s120] %v363
                %v365 = vld [vmem:[%s127 + $0x730] sm:%s120]
                %366 = vst [vmem:[%s128 + $0x3b0] sm:%s120] %v365
                %v367 = vld [vmem:[%s127 + $0x738] sm:%s120]
                %368 = vst [vmem:[%s128 + $0x3b8] sm:%s120] %v367
                %v369 = vld [vmem:[%s127 + $0x740] sm:%s120]
                %370 = vst [vmem:[%s128 + $0x3c0] sm:%s120] %v369
                %v371 = vld [vmem:[%s127 + $0x748] sm:%s120]
                %372 = vst [vmem:[%s128 + $0x3c8] sm:%s120] %v371
                %v373 = vld [vmem:[%s127 + $0x750] sm:%s120]
                %374 = vst [vmem:[%s128 + $0x3d0] sm:%s120] %v373
                %v375 = vld [vmem:[%s127 + $0x758] sm:%s120]
                %376 = vst [vmem:[%s128 + $0x3d8] sm:%s120] %v375
                %v377 = vld [vmem:[%s127 + $0x760] sm:%s120]
                %378 = vst [vmem:[%s128 + $0x3e0] sm:%s120] %v377
                %v379 = vld [vmem:[%s127 + $0x768] sm:%s120]
                %380 = vst [vmem:[%s128 + $0x3e8] sm:%s120] %v379
                %v381 = vld [vmem:[%s127 + $0x770] sm:%s120]
                %382 = vst [vmem:[%s128 + $0x3f0] sm:%s120] %v381
                %v383 = vld [vmem:[%s127 + $0x778] sm:%s120]
                %384 = vst [vmem:[%s128 + $0x3f8] sm:%s120] %v383
                %v385 = vld [vmem:[%s127 + $0x800] sm:%s120]
                %386 = vst [vmem:[%s128 + $0x400] sm:%s120] %v385
                %v387 = vld [vmem:[%s127 + $0x808] sm:%s120]
                %388 = vst [vmem:[%s128 + $0x408] sm:%s120] %v387
                %v389 = vld [vmem:[%s127 + $0x810] sm:%s120]
                %390 = vst [vmem:[%s128 + $0x410] sm:%s120] %v389
                %v391 = vld [vmem:[%s127 + $0x818] sm:%s120]
                %392 = vst [vmem:[%s128 + $0x418] sm:%s120] %v391
                %v393 = vld [vmem:[%s127 + $0x820] sm:%s120]
                %394 = vst [vmem:[%s128 + $0x420] sm:%s120] %v393
                %v395 = vld [vmem:[%s127 + $0x828] sm:%s120]
                %396 = vst [vmem:[%s128 + $0x428] sm:%s120] %v395
                %v397 = vld [vmem:[%s127 + $0x830] sm:%s120]
                %398 = vst [vmem:[%s128 + $0x430] sm:%s120] %v397
                %v399 = vld [vmem:[%s127 + $0x838] sm:%s120]
                %400 = vst [vmem:[%s128 + $0x438] sm:%s120] %v399
                %v401 = vld [vmem:[%s127 + $0x840] sm:%s120]
                %402 = vst [vmem:[%s128 + $0x440] sm:%s120] %v401
                %v403 = vld [vmem:[%s127 + $0x848] sm:%s120]
                %404 = vst [vmem:[%s128 + $0x448] sm:%s120] %v403
                %v405 = vld [vmem:[%s127 + $0x850] sm:%s120]
                %406 = vst [vmem:[%s128 + $0x450] sm:%s120] %v405
                %v407 = vld [vmem:[%s127 + $0x858] sm:%s120]
                %408 = vst [vmem:[%s128 + $0x458] sm:%s120] %v407
                %v409 = vld [vmem:[%s127 + $0x860] sm:%s120]
                %410 = vst [vmem:[%s128 + $0x460] sm:%s120] %v409
                %v411 = vld [vmem:[%s127 + $0x868] sm:%s120]
                %412 = vst [vmem:[%s128 + $0x468] sm:%s120] %v411
                %v413 = vld [vmem:[%s127 + $0x870] sm:%s120]
                %414 = vst [vmem:[%s128 + $0x470] sm:%s120] %v413
                %v415 = vld [vmem:[%s127 + $0x878] sm:%s120]
                %416 = vst [vmem:[%s128 + $0x478] sm:%s120] %v415
              $region41: #{basic_conv3d.1} parent=35 // loop_footer
                %s126 = sadd.s32 1, %s122
              $region42: #{basic_conv3d.1} parent=35 // loop_footer_branch
                %121 = sbr.rel target = $region38
              $region43: #{basic_conv3d.1} parent=35 // loop_exit
                _
            $region36: #{basic_conv3d.1} parent=27 // pred_fallthru
              _
          $region28: #{basic_conv3d.1} parent=23 // pred_fallthru
            _
          %717 = vnop
        $region24: #{basic_conv3d.1} parent=19 // pred_fallthru
          _
      $region20: #{basic_conv3d.1} parent=5 // pred_fallthru
        _
      %p718 = scmp.le.s32.totalorder 1, %s8
      %p719 = scmp.lt.s32.totalorder %s8, 3
      %p720 = pnand %p718, %p719
      %p721 = pneg %p720
      // Predicated region
      $region59: #{basic_conv3d.1} parent=5 // pred_check
        _
      $region60: #{basic_conv3d.1} parent=5 // pred_check_branch
        %723 = sbr.rel (%p720) target = $region62
      $region61: #{basic_conv3d.1} parent=5 // pred_region
        %s724 = ssub.s32 %s8, 1
        %s725 = sand.u32 %s21, 1
        %s726 = sand.u32 %s21, 1
        %s727 = smul.addr %s726, 1152
        %s728 = scalar_lea.vmem [#allocation2], %s727
        // Predicated region
        $region63: #{basic_conv3d.1} parent=61 // pred_check
          %p729 = pneg %p34
        $region64: #{basic_conv3d.1} parent=61 // pred_check_branch
          %731 = sbr.rel (%p729) target = $region66
        $region65: #{basic_conv3d.1} parent=61 // pred_region
          _
        $region66: #{basic_conv3d.1} parent=61 // pred_fallthru
          _
        %s732 = sand.u32 %s21, 1
        %s733 = sand.u32 %s21, 1
        %s734 = smul.addr %s733, 1152
        %s735 = scalar_lea.vmem [#allocation2], %s734
        %p736 = pneg %p34
        %p737 = pneg %p31
        %p738 = pneg %p55
        %p739 = pneg %p52
        %p740 = pneg %p81
        %p741 = pneg %p78
        %s742 = smul.u32 16, %s13
        %p743 = scmp.lt.s32.totalorder %s742, 31
        %s744 = scalar_select %p743, %s742, 31
        %s745 = smul.addr %s744, 8
        %s746 = scalar_lea.vmem %s2, %s745
        %s747 = smul.u32 16, %s13
        %s748 = smul.u32 16, %s13
        %p749 = scmp.lt.s32.totalorder %s748, 31
        %s750 = scalar_select %p749, %s748, 31
        %s751 = smul.addr %s750, 8
        %s752 = scalar_lea.vmem %s2, %s751
        %s753 = smul.u32 16, %s13
        %v754 = vld [vmem:[%s728] sm:$0xff]
        %v755 = vld [vmem:[%s728 + $0x8] sm:$0xff]
        %v756 = vld [vmem:[%s728 + $0x10] sm:$0xff]
        %v757 = vld [vmem:[%s728 + $0x18] sm:$0xff]
        %v758 = vld [vmem:[%s728 + $0x20] sm:$0xff]
        %v759 = vld [vmem:[%s728 + $0x28] sm:$0xff]
        %v760 = vld [vmem:[%s728 + $0x30] sm:$0xff]
        %v761 = vld [vmem:[%s728 + $0x38] sm:$0xff]
        %v762 = vld [vmem:[%s728 + $0x40] sm:$0xff]
        %v763 = vld [vmem:[%s728 + $0x48] sm:$0xff]
        %v764 = vld [vmem:[%s728 + $0x50] sm:$0xff]
        %v765 = vld [vmem:[%s728 + $0x58] sm:$0xff]
        %v766 = vld [vmem:[%s728 + $0x60] sm:$0xff]
        %v767 = vld [vmem:[%s728 + $0x68] sm:$0xff]
        %v768 = vld [vmem:[%s728 + $0x70] sm:$0xff]
        %v769 = vld [vmem:[%s728 + $0x78] sm:$0xff]
        %v770 = vld [vmem:[%s1] sm:$0xff]
        %v771 = vld [vmem:[%s1 + $0x8] sm:$0xff]
        %v772 = vld [vmem:[%s1 + $0x10] sm:$0xff]
        %v773 = vld [vmem:[%s1 + $0x18] sm:$0xff]
        %v774 = vld [vmem:[%s1 + $0x20] sm:$0xff]
        %v775 = vld [vmem:[%s1 + $0x28] sm:$0xff]
        %v776 = vld [vmem:[%s1 + $0x30] sm:$0xff]
        %v777 = vld [vmem:[%s1 + $0x38] sm:$0xff]
        %v778 = vld [vmem:[%s1 + $0x40] sm:$0xff]
        %v779 = vld [vmem:[%s1 + $0x48] sm:$0xff]
        %v780 = vld [vmem:[%s1 + $0x50] sm:$0xff]
        %v781 = vld [vmem:[%s1 + $0x58] sm:$0xff]
        %v782 = vld [vmem:[%s1 + $0x60] sm:$0xff]
        %v783 = vld [vmem:[%s1 + $0x68] sm:$0xff]
        %v784 = vld [vmem:[%s1 + $0x70] sm:$0xff]
        %v785 = vld [vmem:[%s1 + $0x78] sm:$0xff]
        %s786 = scalar_lea.vmem %s728, 128 [#allocation2]
        %v787 = vld [vmem:[%s786] sm:$0xff]
        %v788 = vld [vmem:[%s786 + $0x8] sm:$0xff]
        %v789 = vld [vmem:[%s786 + $0x10] sm:$0xff]
        %v790 = vld [vmem:[%s786 + $0x18] sm:$0xff]
        %v791 = vld [vmem:[%s786 + $0x20] sm:$0xff]
        %v792 = vld [vmem:[%s786 + $0x28] sm:$0xff]
        %v793 = vld [vmem:[%s786 + $0x30] sm:$0xff]
        %v794 = vld [vmem:[%s786 + $0x38] sm:$0xff]
        %v795 = vld [vmem:[%s786 + $0x40] sm:$0xff]
        %v796 = vld [vmem:[%s786 + $0x48] sm:$0xff]
        %v797 = vld [vmem:[%s786 + $0x50] sm:$0xff]
        %v798 = vld [vmem:[%s786 + $0x58] sm:$0xff]
        %v799 = vld [vmem:[%s786 + $0x60] sm:$0xff]
        %v800 = vld [vmem:[%s786 + $0x68] sm:$0xff]
        %v801 = vld [vmem:[%s786 + $0x70] sm:$0xff]
        %v802 = vld [vmem:[%s786 + $0x78] sm:$0xff]
        %s803 = scalar_lea.vmem %s1, 128
        %v804 = vld [vmem:[%s803] sm:$0xff]
        %v805 = vld [vmem:[%s803 + $0x8] sm:$0xff]
        %v806 = vld [vmem:[%s803 + $0x10] sm:$0xff]
        %v807 = vld [vmem:[%s803 + $0x18] sm:$0xff]
        %v808 = vld [vmem:[%s803 + $0x20] sm:$0xff]
        %v809 = vld [vmem:[%s803 + $0x28] sm:$0xff]
        %v810 = vld [vmem:[%s803 + $0x30] sm:$0xff]
        %v811 = vld [vmem:[%s803 + $0x38] sm:$0xff]
        %v812 = vld [vmem:[%s803 + $0x40] sm:$0xff]
        %v813 = vld [vmem:[%s803 + $0x48] sm:$0xff]
        %v814 = vld [vmem:[%s803 + $0x50] sm:$0xff]
        %v815 = vld [vmem:[%s803 + $0x58] sm:$0xff]
        %v816 = vld [vmem:[%s803 + $0x60] sm:$0xff]
        %v817 = vld [vmem:[%s803 + $0x68] sm:$0xff]
        %v818 = vld [vmem:[%s803 + $0x70] sm:$0xff]
        %v819 = vld [vmem:[%s803 + $0x78] sm:$0xff]
        %820 = vmatpush.msra.mxu0 %v819
        %821 = vmatpush.msra.mxu0 %v818
        %822 = vmatpush.msra.mxu0 %v817
        %823 = vmatpush.msra.mxu0 %v816
        %824 = vmatpush.msra.mxu0 %v815
        %825 = vmatpush.msra.mxu0 %v814
        %826 = vmatpush.msra.mxu0 %v813
        %827 = vmatpush.msra.mxu0 %v812
        %828 = vmatpush.msra.mxu0 %v811
        %829 = vmatpush.msra.mxu0 %v810
        %830 = vmatpush.msra.mxu0 %v809
        %831 = vmatpush.msra.mxu0 %v808
        %832 = vmatpush.msra.mxu0 %v807
        %833 = vmatpush.msra.mxu0 %v806
        %834 = vmatpush.msra.mxu0 %v805
        %835 = vmatpush.msra.mxu0 %v804
        %836 = vmatmul.f32.gmra.mxu0 %v787
        %v837 = vpop.f32.mrf.mxu0
        %v838 = vadd.f32 0.0, %v837
        %839 = vmatmul.f32.gmra.mxu0 %v788
        %v840 = vpop.f32.mrf.mxu0
        %v841 = vadd.f32 0.0, %v840
        %842 = vmatmul.f32.gmra.mxu0 %v789
        %v843 = vpop.f32.mrf.mxu0
        %v844 = vadd.f32 0.0, %v843
        %845 = vmatmul.f32.gmra.mxu0 %v790
        %v846 = vpop.f32.mrf.mxu0
        %v847 = vadd.f32 0.0, %v846
        %848 = vmatmul.f32.gmra.mxu0 %v791
        %v849 = vpop.f32.mrf.mxu0
        %v850 = vadd.f32 0.0, %v849
        %851 = vmatmul.f32.gmra.mxu0 %v792
        %v852 = vpop.f32.mrf.mxu0
        %v853 = vadd.f32 0.0, %v852
        %854 = vmatmul.f32.gmra.mxu0 %v793
        %v855 = vpop.f32.mrf.mxu0
        %v856 = vadd.f32 0.0, %v855
        %857 = vmatmul.f32.gmra.mxu0 %v794
        %v858 = vpop.f32.mrf.mxu0
        %v859 = vadd.f32 0.0, %v858
        %860 = vmatmul.f32.gmra.mxu0 %v795
        %v861 = vpop.f32.mrf.mxu0
        %v862 = vadd.f32 0.0, %v861
        %863 = vmatmul.f32.gmra.mxu0 %v796
        %v864 = vpop.f32.mrf.mxu0
        %v865 = vadd.f32 0.0, %v864
        %866 = vmatmul.f32.gmra.mxu0 %v797
        %v867 = vpop.f32.mrf.mxu0
        %v868 = vadd.f32 0.0, %v867
        %869 = vmatmul.f32.gmra.mxu0 %v798
        %v870 = vpop.f32.mrf.mxu0
        %v871 = vadd.f32 0.0, %v870
        %872 = vmatmul.f32.gmra.mxu0 %v799
        %v873 = vpop.f32.mrf.mxu0
        %v874 = vadd.f32 0.0, %v873
        %875 = vmatmul.f32.gmra.mxu0 %v800
        %v876 = vpop.f32.mrf.mxu0
        %v877 = vadd.f32 0.0, %v876
        %878 = vmatmul.f32.gmra.mxu0 %v801
        %v879 = vpop.f32.mrf.mxu0
        %v880 = vadd.f32 0.0, %v879
        %881 = vmatmul.f32.gmra.mxu0 %v802
        %v882 = vpop.f32.mrf.mxu0
        %v883 = vadd.f32 0.0, %v882
        %884 = vdwg.mxu0
        %885 = vmatpush.msra.mxu0 %v785
        %886 = vmatpush.msra.mxu0 %v784
        %887 = vmatpush.msra.mxu0 %v783
        %888 = vmatpush.msra.mxu0 %v782
        %889 = vmatpush.msra.mxu0 %v781
        %890 = vmatpush.msra.mxu0 %v780
        %891 = vmatpush.msra.mxu0 %v779
        %892 = vmatpush.msra.mxu0 %v778
        %893 = vmatpush.msra.mxu0 %v777
        %894 = vmatpush.msra.mxu0 %v776
        %895 = vmatpush.msra.mxu0 %v775
        %896 = vmatpush.msra.mxu0 %v774
        %897 = vmatpush.msra.mxu0 %v773
        %898 = vmatpush.msra.mxu0 %v772
        %899 = vmatpush.msra.mxu0 %v771
        %900 = vmatpush.msra.mxu0 %v770
        %901 = vmatmul.f32.gmra.mxu0 %v754
        %v902 = vpop.f32.mrf.mxu0
        %v903 = vadd.f32 %v838, %v902
        %904 = vmatmul.f32.gmra.mxu0 %v755
        %v905 = vpop.f32.mrf.mxu0
        %v906 = vadd.f32 %v841, %v905
        %907 = vmatmul.f32.gmra.mxu0 %v756
        %v908 = vpop.f32.mrf.mxu0
        %v909 = vadd.f32 %v844, %v908
        %910 = vmatmul.f32.gmra.mxu0 %v757
        %v911 = vpop.f32.mrf.mxu0
        %v912 = vadd.f32 %v847, %v911
        %913 = vmatmul.f32.gmra.mxu0 %v758
        %v914 = vpop.f32.mrf.mxu0
        %v915 = vadd.f32 %v850, %v914
        %916 = vmatmul.f32.gmra.mxu0 %v759
        %v917 = vpop.f32.mrf.mxu0
        %v918 = vadd.f32 %v853, %v917
        %919 = vmatmul.f32.gmra.mxu0 %v760
        %v920 = vpop.f32.mrf.mxu0
        %v921 = vadd.f32 %v856, %v920
        %922 = vmatmul.f32.gmra.mxu0 %v761
        %v923 = vpop.f32.mrf.mxu0
        %v924 = vadd.f32 %v859, %v923
        %925 = vmatmul.f32.gmra.mxu0 %v762
        %v926 = vpop.f32.mrf.mxu0
        %v927 = vadd.f32 %v862, %v926
        %928 = vmatmul.f32.gmra.mxu0 %v763
        %v929 = vpop.f32.mrf.mxu0
        %v930 = vadd.f32 %v865, %v929
        %931 = vmatmul.f32.gmra.mxu0 %v764
        %v932 = vpop.f32.mrf.mxu0
        %v933 = vadd.f32 %v868, %v932
        %934 = vmatmul.f32.gmra.mxu0 %v765
        %v935 = vpop.f32.mrf.mxu0
        %v936 = vadd.f32 %v871, %v935
        %937 = vmatmul.f32.gmra.mxu0 %v766
        %v938 = vpop.f32.mrf.mxu0
        %v939 = vadd.f32 %v874, %v938
        %940 = vmatmul.f32.gmra.mxu0 %v767
        %v941 = vpop.f32.mrf.mxu0
        %v942 = vadd.f32 %v877, %v941
        %943 = vmatmul.f32.gmra.mxu0 %v768
        %v944 = vpop.f32.mrf.mxu0
        %v945 = vadd.f32 %v880, %v944
        %946 = vmatmul.f32.gmra.mxu0 %v769
        %v947 = vpop.f32.mrf.mxu0
        %v948 = vadd.f32 %v883, %v947
        %949 = vdwg.mxu0
        %s950 = scalar_lea.vmem %s728, 256 [#allocation2]
        %v951 = vld [vmem:[%s950] sm:$0xff]
        %v952 = vld [vmem:[%s950 + $0x8] sm:$0xff]
        %v953 = vld [vmem:[%s950 + $0x10] sm:$0xff]
        %v954 = vld [vmem:[%s950 + $0x18] sm:$0xff]
        %v955 = vld [vmem:[%s950 + $0x20] sm:$0xff]
        %v956 = vld [vmem:[%s950 + $0x28] sm:$0xff]
        %v957 = vld [vmem:[%s950 + $0x30] sm:$0xff]
        %v958 = vld [vmem:[%s950 + $0x38] sm:$0xff]
        %v959 = vld [vmem:[%s950 + $0x40] sm:$0xff]
        %v960 = vld [vmem:[%s950 + $0x48] sm:$0xff]
        %v961 = vld [vmem:[%s950 + $0x50] sm:$0xff]
        %v962 = vld [vmem:[%s950 + $0x58] sm:$0xff]
        %v963 = vld [vmem:[%s950 + $0x60] sm:$0xff]
        %v964 = vld [vmem:[%s950 + $0x68] sm:$0xff]
        %v965 = vld [vmem:[%s950 + $0x70] sm:$0xff]
        %v966 = vld [vmem:[%s950 + $0x78] sm:$0xff]
        %s967 = scalar_lea.vmem %s1, 256
        %v968 = vld [vmem:[%s967] sm:$0xff]
        %v969 = vld [vmem:[%s967 + $0x8] sm:$0xff]
        %v970 = vld [vmem:[%s967 + $0x10] sm:$0xff]
        %v971 = vld [vmem:[%s967 + $0x18] sm:$0xff]
        %v972 = vld [vmem:[%s967 + $0x20] sm:$0xff]
        %v973 = vld [vmem:[%s967 + $0x28] sm:$0xff]
        %v974 = vld [vmem:[%s967 + $0x30] sm:$0xff]
        %v975 = vld [vmem:[%s967 + $0x38] sm:$0xff]
        %v976 = vld [vmem:[%s967 + $0x40] sm:$0xff]
        %v977 = vld [vmem:[%s967 + $0x48] sm:$0xff]
        %v978 = vld [vmem:[%s967 + $0x50] sm:$0xff]
        %v979 = vld [vmem:[%s967 + $0x58] sm:$0xff]
        %v980 = vld [vmem:[%s967 + $0x60] sm:$0xff]
        %v981 = vld [vmem:[%s967 + $0x68] sm:$0xff]
        %v982 = vld [vmem:[%s967 + $0x70] sm:$0xff]
        %v983 = vld [vmem:[%s967 + $0x78] sm:$0xff]
        %984 = vmatpush.msra.mxu0 %v983
        %985 = vmatpush.msra.mxu0 %v982
        %986 = vmatpush.msra.mxu0 %v981
        %987 = vmatpush.msra.mxu0 %v980
        %988 = vmatpush.msra.mxu0 %v979
        %989 = vmatpush.msra.mxu0 %v978
        %990 = vmatpush.msra.mxu0 %v977
        %991 = vmatpush.msra.mxu0 %v976
        %992 = vmatpush.msra.mxu0 %v975
        %993 = vmatpush.msra.mxu0 %v974
        %994 = vmatpush.msra.mxu0 %v973
        %995 = vmatpush.msra.mxu0 %v972
        %996 = vmatpush.msra.mxu0 %v971
        %997 = vmatpush.msra.mxu0 %v970
        %998 = vmatpush.msra.mxu0 %v969
        %999 = vmatpush.msra.mxu0 %v968
        %1000 = vmatmul.f32.gmra.mxu0 %v951
        %v1001 = vpop.f32.mrf.mxu0
        %v1002 = vadd.f32 0.0, %v1001
        %1003 = vmatmul.f32.gmra.mxu0 %v952
        %v1004 = vpop.f32.mrf.mxu0
        %v1005 = vadd.f32 0.0, %v1004
        %1006 = vmatmul.f32.gmra.mxu0 %v953
        %v1007 = vpop.f32.mrf.mxu0
        %v1008 = vadd.f32 0.0, %v1007
        %1009 = vmatmul.f32.gmra.mxu0 %v954
        %v1010 = vpop.f32.mrf.mxu0
        %v1011 = vadd.f32 0.0, %v1010
        %1012 = vmatmul.f32.gmra.mxu0 %v955
        %v1013 = vpop.f32.mrf.mxu0
        %v1014 = vadd.f32 0.0, %v1013
        %1015 = vmatmul.f32.gmra.mxu0 %v956
        %v1016 = vpop.f32.mrf.mxu0
        %v1017 = vadd.f32 0.0, %v1016
        %1018 = vmatmul.f32.gmra.mxu0 %v957
        %v1019 = vpop.f32.mrf.mxu0
        %v1020 = vadd.f32 0.0, %v1019
        %1021 = vmatmul.f32.gmra.mxu0 %v958
        %v1022 = vpop.f32.mrf.mxu0
        %v1023 = vadd.f32 0.0, %v1022
        %1024 = vmatmul.f32.gmra.mxu0 %v959
        %v1025 = vpop.f32.mrf.mxu0
        %v1026 = vadd.f32 0.0, %v1025
        %1027 = vmatmul.f32.gmra.mxu0 %v960
        %v1028 = vpop.f32.mrf.mxu0
        %v1029 = vadd.f32 0.0, %v1028
        %1030 = vmatmul.f32.gmra.mxu0 %v961
        %v1031 = vpop.f32.mrf.mxu0
        %v1032 = vadd.f32 0.0, %v1031
        %1033 = vmatmul.f32.gmra.mxu0 %v962
        %v1034 = vpop.f32.mrf.mxu0
        %v1035 = vadd.f32 0.0, %v1034
        %1036 = vmatmul.f32.gmra.mxu0 %v963
        %v1037 = vpop.f32.mrf.mxu0
        %v1038 = vadd.f32 0.0, %v1037
        %1039 = vmatmul.f32.gmra.mxu0 %v964
        %v1040 = vpop.f32.mrf.mxu0
        %v1041 = vadd.f32 0.0, %v1040
        %1042 = vmatmul.f32.gmra.mxu0 %v965
        %v1043 = vpop.f32.mrf.mxu0
        %v1044 = vadd.f32 0.0, %v1043
        %1045 = vmatmul.f32.gmra.mxu0 %v966
        %v1046 = vpop.f32.mrf.mxu0
        %v1047 = vadd.f32 0.0, %v1046
        %1048 = vdwg.mxu0
        %v1049 = vadd.f32 %v903, %v1002
        %v1050 = vadd.f32 %v906, %v1005
        %v1051 = vadd.f32 %v909, %v1008
        %v1052 = vadd.f32 %v912, %v1011
        %v1053 = vadd.f32 %v915, %v1014
        %v1054 = vadd.f32 %v918, %v1017
        %v1055 = vadd.f32 %v921, %v1020
        %v1056 = vadd.f32 %v924, %v1023
        %v1057 = vadd.f32 %v927, %v1026
        %v1058 = vadd.f32 %v930, %v1029
        %v1059 = vadd.f32 %v933, %v1032
        %v1060 = vadd.f32 %v936, %v1035
        %v1061 = vadd.f32 %v939, %v1038
        %v1062 = vadd.f32 %v942, %v1041
        %v1063 = vadd.f32 %v945, %v1044
        %v1064 = vadd.f32 %v948, %v1047
        %s1065 = scalar_lea.vmem %s728, 384 [#allocation2]
        %v1066 = vld [vmem:[%s1065] sm:$0xff]
        %v1067 = vld [vmem:[%s1065 + $0x8] sm:$0xff]
        %v1068 = vld [vmem:[%s1065 + $0x10] sm:$0xff]
        %v1069 = vld [vmem:[%s1065 + $0x18] sm:$0xff]
        %v1070 = vld [vmem:[%s1065 + $0x20] sm:$0xff]
        %v1071 = vld [vmem:[%s1065 + $0x28] sm:$0xff]
        %v1072 = vld [vmem:[%s1065 + $0x30] sm:$0xff]
        %v1073 = vld [vmem:[%s1065 + $0x38] sm:$0xff]
        %v1074 = vld [vmem:[%s1065 + $0x40] sm:$0xff]
        %v1075 = vld [vmem:[%s1065 + $0x48] sm:$0xff]
        %v1076 = vld [vmem:[%s1065 + $0x50] sm:$0xff]
        %v1077 = vld [vmem:[%s1065 + $0x58] sm:$0xff]
        %v1078 = vld [vmem:[%s1065 + $0x60] sm:$0xff]
        %v1079 = vld [vmem:[%s1065 + $0x68] sm:$0xff]
        %v1080 = vld [vmem:[%s1065 + $0x70] sm:$0xff]
        %v1081 = vld [vmem:[%s1065 + $0x78] sm:$0xff]
        %s1082 = scalar_lea.vmem %s1, 384
        %v1083 = vld [vmem:[%s1082] sm:$0xff]
        %v1084 = vld [vmem:[%s1082 + $0x8] sm:$0xff]
        %v1085 = vld [vmem:[%s1082 + $0x10] sm:$0xff]
        %v1086 = vld [vmem:[%s1082 + $0x18] sm:$0xff]
        %v1087 = vld [vmem:[%s1082 + $0x20] sm:$0xff]
        %v1088 = vld [vmem:[%s1082 + $0x28] sm:$0xff]
        %v1089 = vld [vmem:[%s1082 + $0x30] sm:$0xff]
        %v1090 = vld [vmem:[%s1082 + $0x38] sm:$0xff]
        %v1091 = vld [vmem:[%s1082 + $0x40] sm:$0xff]
        %v1092 = vld [vmem:[%s1082 + $0x48] sm:$0xff]
        %v1093 = vld [vmem:[%s1082 + $0x50] sm:$0xff]
        %v1094 = vld [vmem:[%s1082 + $0x58] sm:$0xff]
        %v1095 = vld [vmem:[%s1082 + $0x60] sm:$0xff]
        %v1096 = vld [vmem:[%s1082 + $0x68] sm:$0xff]
        %v1097 = vld [vmem:[%s1082 + $0x70] sm:$0xff]
        %v1098 = vld [vmem:[%s1082 + $0x78] sm:$0xff]
        %1099 = vmatpush.msra.mxu0 %v1098
        %1100 = vmatpush.msra.mxu0 %v1097
        %1101 = vmatpush.msra.mxu0 %v1096
        %1102 = vmatpush.msra.mxu0 %v1095
        %1103 = vmatpush.msra.mxu0 %v1094
        %1104 = vmatpush.msra.mxu0 %v1093
        %1105 = vmatpush.msra.mxu0 %v1092
        %1106 = vmatpush.msra.mxu0 %v1091
        %1107 = vmatpush.msra.mxu0 %v1090
        %1108 = vmatpush.msra.mxu0 %v1089
        %1109 = vmatpush.msra.mxu0 %v1088
        %1110 = vmatpush.msra.mxu0 %v1087
        %1111 = vmatpush.msra.mxu0 %v1086
        %1112 = vmatpush.msra.mxu0 %v1085
        %1113 = vmatpush.msra.mxu0 %v1084
        %1114 = vmatpush.msra.mxu0 %v1083
        %1115 = vmatmul.f32.gmra.mxu0 %v1066
        %v1116 = vpop.f32.mrf.mxu0
        %v1117 = vadd.f32 0.0, %v1116
        %1118 = vmatmul.f32.gmra.mxu0 %v1067
        %v1119 = vpop.f32.mrf.mxu0
        %v1120 = vadd.f32 0.0, %v1119
        %1121 = vmatmul.f32.gmra.mxu0 %v1068
        %v1122 = vpop.f32.mrf.mxu0
        %v1123 = vadd.f32 0.0, %v1122
        %1124 = vmatmul.f32.gmra.mxu0 %v1069
        %v1125 = vpop.f32.mrf.mxu0
        %v1126 = vadd.f32 0.0, %v1125
        %1127 = vmatmul.f32.gmra.mxu0 %v1070
        %v1128 = vpop.f32.mrf.mxu0
        %v1129 = vadd.f32 0.0, %v1128
        %1130 = vmatmul.f32.gmra.mxu0 %v1071
        %v1131 = vpop.f32.mrf.mxu0
        %v1132 = vadd.f32 0.0, %v1131
        %1133 = vmatmul.f32.gmra.mxu0 %v1072
        %v1134 = vpop.f32.mrf.mxu0
        %v1135 = vadd.f32 0.0, %v1134
        %1136 = vmatmul.f32.gmra.mxu0 %v1073
        %v1137 = vpop.f32.mrf.mxu0
        %v1138 = vadd.f32 0.0, %v1137
        %1139 = vmatmul.f32.gmra.mxu0 %v1074
        %v1140 = vpop.f32.mrf.mxu0
        %v1141 = vadd.f32 0.0, %v1140
        %1142 = vmatmul.f32.gmra.mxu0 %v1075
        %v1143 = vpop.f32.mrf.mxu0
        %v1144 = vadd.f32 0.0, %v1143
        %1145 = vmatmul.f32.gmra.mxu0 %v1076
        %v1146 = vpop.f32.mrf.mxu0
        %v1147 = vadd.f32 0.0, %v1146
        %1148 = vmatmul.f32.gmra.mxu0 %v1077
        %v1149 = vpop.f32.mrf.mxu0
        %v1150 = vadd.f32 0.0, %v1149
        %1151 = vmatmul.f32.gmra.mxu0 %v1078
        %v1152 = vpop.f32.mrf.mxu0
        %v1153 = vadd.f32 0.0, %v1152
        %1154 = vmatmul.f32.gmra.mxu0 %v1079
        %v1155 = vpop.f32.mrf.mxu0
        %v1156 = vadd.f32 0.0, %v1155
        %1157 = vmatmul.f32.gmra.mxu0 %v1080
        %v1158 = vpop.f32.mrf.mxu0
        %v1159 = vadd.f32 0.0, %v1158
        %1160 = vmatmul.f32.gmra.mxu0 %v1081
        %v1161 = vpop.f32.mrf.mxu0
        %v1162 = vadd.f32 0.0, %v1161
        %1163 = vdwg.mxu0
        %v1164 = vadd.f32 %v1049, %v1117
        %v1165 = vadd.f32 %v1050, %v1120
        %v1166 = vadd.f32 %v1051, %v1123
        %v1167 = vadd.f32 %v1052, %v1126
        %v1168 = vadd.f32 %v1053, %v1129
        %v1169 = vadd.f32 %v1054, %v1132
        %v1170 = vadd.f32 %v1055, %v1135
        %v1171 = vadd.f32 %v1056, %v1138
        %v1172 = vadd.f32 %v1057, %v1141
        %v1173 = vadd.f32 %v1058, %v1144
        %v1174 = vadd.f32 %v1059, %v1147
        %v1175 = vadd.f32 %v1060, %v1150
        %v1176 = vadd.f32 %v1061, %v1153
        %v1177 = vadd.f32 %v1062, %v1156
        %v1178 = vadd.f32 %v1063, %v1159
        %v1179 = vadd.f32 %v1064, %v1162
        %s1180 = scalar_lea.vmem %s728, 512 [#allocation2]
        %v1181 = vld [vmem:[%s1180] sm:$0xff]
        %v1182 = vld [vmem:[%s1180 + $0x8] sm:$0xff]
        %v1183 = vld [vmem:[%s1180 + $0x10] sm:$0xff]
        %v1184 = vld [vmem:[%s1180 + $0x18] sm:$0xff]
        %v1185 = vld [vmem:[%s1180 + $0x20] sm:$0xff]
        %v1186 = vld [vmem:[%s1180 + $0x28] sm:$0xff]
        %v1187 = vld [vmem:[%s1180 + $0x30] sm:$0xff]
        %v1188 = vld [vmem:[%s1180 + $0x38] sm:$0xff]
        %v1189 = vld [vmem:[%s1180 + $0x40] sm:$0xff]
        %v1190 = vld [vmem:[%s1180 + $0x48] sm:$0xff]
        %v1191 = vld [vmem:[%s1180 + $0x50] sm:$0xff]
        %v1192 = vld [vmem:[%s1180 + $0x58] sm:$0xff]
        %v1193 = vld [vmem:[%s1180 + $0x60] sm:$0xff]
        %v1194 = vld [vmem:[%s1180 + $0x68] sm:$0xff]
        %v1195 = vld [vmem:[%s1180 + $0x70] sm:$0xff]
        %v1196 = vld [vmem:[%s1180 + $0x78] sm:$0xff]
        %s1197 = scalar_lea.vmem %s1, 512
        %v1198 = vld [vmem:[%s1197] sm:$0xff]
        %v1199 = vld [vmem:[%s1197 + $0x8] sm:$0xff]
        %v1200 = vld [vmem:[%s1197 + $0x10] sm:$0xff]
        %v1201 = vld [vmem:[%s1197 + $0x18] sm:$0xff]
        %v1202 = vld [vmem:[%s1197 + $0x20] sm:$0xff]
        %v1203 = vld [vmem:[%s1197 + $0x28] sm:$0xff]
        %v1204 = vld [vmem:[%s1197 + $0x30] sm:$0xff]
        %v1205 = vld [vmem:[%s1197 + $0x38] sm:$0xff]
        %v1206 = vld [vmem:[%s1197 + $0x40] sm:$0xff]
        %v1207 = vld [vmem:[%s1197 + $0x48] sm:$0xff]
        %v1208 = vld [vmem:[%s1197 + $0x50] sm:$0xff]
        %v1209 = vld [vmem:[%s1197 + $0x58] sm:$0xff]
        %v1210 = vld [vmem:[%s1197 + $0x60] sm:$0xff]
        %v1211 = vld [vmem:[%s1197 + $0x68] sm:$0xff]
        %v1212 = vld [vmem:[%s1197 + $0x70] sm:$0xff]
        %v1213 = vld [vmem:[%s1197 + $0x78] sm:$0xff]
        %1214 = vmatpush.msra.mxu0 %v1213
        %1215 = vmatpush.msra.mxu0 %v1212
        %1216 = vmatpush.msra.mxu0 %v1211
        %1217 = vmatpush.msra.mxu0 %v1210
        %1218 = vmatpush.msra.mxu0 %v1209
        %1219 = vmatpush.msra.mxu0 %v1208
        %1220 = vmatpush.msra.mxu0 %v1207
        %1221 = vmatpush.msra.mxu0 %v1206
        %1222 = vmatpush.msra.mxu0 %v1205
        %1223 = vmatpush.msra.mxu0 %v1204
        %1224 = vmatpush.msra.mxu0 %v1203
        %1225 = vmatpush.msra.mxu0 %v1202
        %1226 = vmatpush.msra.mxu0 %v1201
        %1227 = vmatpush.msra.mxu0 %v1200
        %1228 = vmatpush.msra.mxu0 %v1199
        %1229 = vmatpush.msra.mxu0 %v1198
        %1230 = vmatmul.f32.gmra.mxu0 %v1181
        %v1231 = vpop.f32.mrf.mxu0
        %v1232 = vadd.f32 0.0, %v1231
        %1233 = vmatmul.f32.gmra.mxu0 %v1182
        %v1234 = vpop.f32.mrf.mxu0
        %v1235 = vadd.f32 0.0, %v1234
        %1236 = vmatmul.f32.gmra.mxu0 %v1183
        %v1237 = vpop.f32.mrf.mxu0
        %v1238 = vadd.f32 0.0, %v1237
        %1239 = vmatmul.f32.gmra.mxu0 %v1184
        %v1240 = vpop.f32.mrf.mxu0
        %v1241 = vadd.f32 0.0, %v1240
        %1242 = vmatmul.f32.gmra.mxu0 %v1185
        %v1243 = vpop.f32.mrf.mxu0
        %v1244 = vadd.f32 0.0, %v1243
        %1245 = vmatmul.f32.gmra.mxu0 %v1186
        %v1246 = vpop.f32.mrf.mxu0
        %v1247 = vadd.f32 0.0, %v1246
        %1248 = vmatmul.f32.gmra.mxu0 %v1187
        %v1249 = vpop.f32.mrf.mxu0
        %v1250 = vadd.f32 0.0, %v1249
        %1251 = vmatmul.f32.gmra.mxu0 %v1188
        %v1252 = vpop.f32.mrf.mxu0
        %v1253 = vadd.f32 0.0, %v1252
        %1254 = vmatmul.f32.gmra.mxu0 %v1189
        %v1255 = vpop.f32.mrf.mxu0
        %v1256 = vadd.f32 0.0, %v1255
        %1257 = vmatmul.f32.gmra.mxu0 %v1190
        %v1258 = vpop.f32.mrf.mxu0
        %v1259 = vadd.f32 0.0, %v1258
        %1260 = vmatmul.f32.gmra.mxu0 %v1191
        %v1261 = vpop.f32.mrf.mxu0
        %v1262 = vadd.f32 0.0, %v1261
        %1263 = vmatmul.f32.gmra.mxu0 %v1192
        %v1264 = vpop.f32.mrf.mxu0
        %v1265 = vadd.f32 0.0, %v1264
        %1266 = vmatmul.f32.gmra.mxu0 %v1193
        %v1267 = vpop.f32.mrf.mxu0
        %v1268 = vadd.f32 0.0, %v1267
        %1269 = vmatmul.f32.gmra.mxu0 %v1194
        %v1270 = vpop.f32.mrf.mxu0
        %v1271 = vadd.f32 0.0, %v1270
        %1272 = vmatmul.f32.gmra.mxu0 %v1195
        %v1273 = vpop.f32.mrf.mxu0
        %v1274 = vadd.f32 0.0, %v1273
        %1275 = vmatmul.f32.gmra.mxu0 %v1196
        %v1276 = vpop.f32.mrf.mxu0
        %v1277 = vadd.f32 0.0, %v1276
        %1278 = vdwg.mxu0
        %v1279 = vadd.f32 %v1164, %v1232
        %v1280 = vadd.f32 %v1165, %v1235
        %v1281 = vadd.f32 %v1166, %v1238
        %v1282 = vadd.f32 %v1167, %v1241
        %v1283 = vadd.f32 %v1168, %v1244
        %v1284 = vadd.f32 %v1169, %v1247
        %v1285 = vadd.f32 %v1170, %v1250
        %v1286 = vadd.f32 %v1171, %v1253
        %v1287 = vadd.f32 %v1172, %v1256
        %v1288 = vadd.f32 %v1173, %v1259
        %v1289 = vadd.f32 %v1174, %v1262
        %v1290 = vadd.f32 %v1175, %v1265
        %v1291 = vadd.f32 %v1176, %v1268
        %v1292 = vadd.f32 %v1177, %v1271
        %v1293 = vadd.f32 %v1178, %v1274
        %v1294 = vadd.f32 %v1179, %v1277
        %s1295 = scalar_lea.vmem %s728, 640 [#allocation2]
        %v1296 = vld [vmem:[%s1295] sm:$0xff]
        %v1297 = vld [vmem:[%s1295 + $0x8] sm:$0xff]
        %v1298 = vld [vmem:[%s1295 + $0x10] sm:$0xff]
        %v1299 = vld [vmem:[%s1295 + $0x18] sm:$0xff]
        %v1300 = vld [vmem:[%s1295 + $0x20] sm:$0xff]
        %v1301 = vld [vmem:[%s1295 + $0x28] sm:$0xff]
        %v1302 = vld [vmem:[%s1295 + $0x30] sm:$0xff]
        %v1303 = vld [vmem:[%s1295 + $0x38] sm:$0xff]
        %v1304 = vld [vmem:[%s1295 + $0x40] sm:$0xff]
        %v1305 = vld [vmem:[%s1295 + $0x48] sm:$0xff]
        %v1306 = vld [vmem:[%s1295 + $0x50] sm:$0xff]
        %v1307 = vld [vmem:[%s1295 + $0x58] sm:$0xff]
        %v1308 = vld [vmem:[%s1295 + $0x60] sm:$0xff]
        %v1309 = vld [vmem:[%s1295 + $0x68] sm:$0xff]
        %v1310 = vld [vmem:[%s1295 + $0x70] sm:$0xff]
        %v1311 = vld [vmem:[%s1295 + $0x78] sm:$0xff]
        %s1312 = scalar_lea.vmem %s1, 640
        %v1313 = vld [vmem:[%s1312] sm:$0xff]
        %v1314 = vld [vmem:[%s1312 + $0x8] sm:$0xff]
        %v1315 = vld [vmem:[%s1312 + $0x10] sm:$0xff]
        %v1316 = vld [vmem:[%s1312 + $0x18] sm:$0xff]
        %v1317 = vld [vmem:[%s1312 + $0x20] sm:$0xff]
        %v1318 = vld [vmem:[%s1312 + $0x28] sm:$0xff]
        %v1319 = vld [vmem:[%s1312 + $0x30] sm:$0xff]
        %v1320 = vld [vmem:[%s1312 + $0x38] sm:$0xff]
        %v1321 = vld [vmem:[%s1312 + $0x40] sm:$0xff]
        %v1322 = vld [vmem:[%s1312 + $0x48] sm:$0xff]
        %v1323 = vld [vmem:[%s1312 + $0x50] sm:$0xff]
        %v1324 = vld [vmem:[%s1312 + $0x58] sm:$0xff]
        %v1325 = vld [vmem:[%s1312 + $0x60] sm:$0xff]
        %v1326 = vld [vmem:[%s1312 + $0x68] sm:$0xff]
        %v1327 = vld [vmem:[%s1312 + $0x70] sm:$0xff]
        %v1328 = vld [vmem:[%s1312 + $0x78] sm:$0xff]
        %1329 = vmatpush.msra.mxu0 %v1328
        %1330 = vmatpush.msra.mxu0 %v1327
        %1331 = vmatpush.msra.mxu0 %v1326
        %1332 = vmatpush.msra.mxu0 %v1325
        %1333 = vmatpush.msra.mxu0 %v1324
        %1334 = vmatpush.msra.mxu0 %v1323
        %1335 = vmatpush.msra.mxu0 %v1322
        %1336 = vmatpush.msra.mxu0 %v1321
        %1337 = vmatpush.msra.mxu0 %v1320
        %1338 = vmatpush.msra.mxu0 %v1319
        %1339 = vmatpush.msra.mxu0 %v1318
        %1340 = vmatpush.msra.mxu0 %v1317
        %1341 = vmatpush.msra.mxu0 %v1316
        %1342 = vmatpush.msra.mxu0 %v1315
        %1343 = vmatpush.msra.mxu0 %v1314
        %1344 = vmatpush.msra.mxu0 %v1313
        %1345 = vmatmul.f32.gmra.mxu0 %v1296
        %v1346 = vpop.f32.mrf.mxu0
        %v1347 = vadd.f32 0.0, %v1346
        %1348 = vmatmul.f32.gmra.mxu0 %v1297
        %v1349 = vpop.f32.mrf.mxu0
        %v1350 = vadd.f32 0.0, %v1349
        %1351 = vmatmul.f32.gmra.mxu0 %v1298
        %v1352 = vpop.f32.mrf.mxu0
        %v1353 = vadd.f32 0.0, %v1352
        %1354 = vmatmul.f32.gmra.mxu0 %v1299
        %v1355 = vpop.f32.mrf.mxu0
        %v1356 = vadd.f32 0.0, %v1355
        %1357 = vmatmul.f32.gmra.mxu0 %v1300
        %v1358 = vpop.f32.mrf.mxu0
        %v1359 = vadd.f32 0.0, %v1358
        %1360 = vmatmul.f32.gmra.mxu0 %v1301
        %v1361 = vpop.f32.mrf.mxu0
        %v1362 = vadd.f32 0.0, %v1361
        %1363 = vmatmul.f32.gmra.mxu0 %v1302
        %v1364 = vpop.f32.mrf.mxu0
        %v1365 = vadd.f32 0.0, %v1364
        %1366 = vmatmul.f32.gmra.mxu0 %v1303
        %v1367 = vpop.f32.mrf.mxu0
        %v1368 = vadd.f32 0.0, %v1367
        %1369 = vmatmul.f32.gmra.mxu0 %v1304
        %v1370 = vpop.f32.mrf.mxu0
        %v1371 = vadd.f32 0.0, %v1370
        %1372 = vmatmul.f32.gmra.mxu0 %v1305
        %v1373 = vpop.f32.mrf.mxu0
        %v1374 = vadd.f32 0.0, %v1373
        %1375 = vmatmul.f32.gmra.mxu0 %v1306
        %v1376 = vpop.f32.mrf.mxu0
        %v1377 = vadd.f32 0.0, %v1376
        %1378 = vmatmul.f32.gmra.mxu0 %v1307
        %v1379 = vpop.f32.mrf.mxu0
        %v1380 = vadd.f32 0.0, %v1379
        %1381 = vmatmul.f32.gmra.mxu0 %v1308
        %v1382 = vpop.f32.mrf.mxu0
        %v1383 = vadd.f32 0.0, %v1382
        %1384 = vmatmul.f32.gmra.mxu0 %v1309
        %v1385 = vpop.f32.mrf.mxu0
        %v1386 = vadd.f32 0.0, %v1385
        %1387 = vmatmul.f32.gmra.mxu0 %v1310
        %v1388 = vpop.f32.mrf.mxu0
        %v1389 = vadd.f32 0.0, %v1388
        %1390 = vmatmul.f32.gmra.mxu0 %v1311
        %v1391 = vpop.f32.mrf.mxu0
        %v1392 = vadd.f32 0.0, %v1391
        %1393 = vdwg.mxu0
        %v1394 = vadd.f32 %v1279, %v1347
        %v1395 = vadd.f32 %v1280, %v1350
        %v1396 = vadd.f32 %v1281, %v1353
        %v1397 = vadd.f32 %v1282, %v1356
        %v1398 = vadd.f32 %v1283, %v1359
        %v1399 = vadd.f32 %v1284, %v1362
        %v1400 = vadd.f32 %v1285, %v1365
        %v1401 = vadd.f32 %v1286, %v1368
        %v1402 = vadd.f32 %v1287, %v1371
        %v1403 = vadd.f32 %v1288, %v1374
        %v1404 = vadd.f32 %v1289, %v1377
        %v1405 = vadd.f32 %v1290, %v1380
        %v1406 = vadd.f32 %v1291, %v1383
        %v1407 = vadd.f32 %v1292, %v1386
        %v1408 = vadd.f32 %v1293, %v1389
        %v1409 = vadd.f32 %v1294, %v1392
        %s1410 = scalar_lea.vmem %s728, 768 [#allocation2]
        %v1411 = vld [vmem:[%s1410] sm:$0xff]
        %v1412 = vld [vmem:[%s1410 + $0x8] sm:$0xff]
        %v1413 = vld [vmem:[%s1410 + $0x10] sm:$0xff]
        %v1414 = vld [vmem:[%s1410 + $0x18] sm:$0xff]
        %v1415 = vld [vmem:[%s1410 + $0x20] sm:$0xff]
        %v1416 = vld [vmem:[%s1410 + $0x28] sm:$0xff]
        %v1417 = vld [vmem:[%s1410 + $0x30] sm:$0xff]
        %v1418 = vld [vmem:[%s1410 + $0x38] sm:$0xff]
        %v1419 = vld [vmem:[%s1410 + $0x40] sm:$0xff]
        %v1420 = vld [vmem:[%s1410 + $0x48] sm:$0xff]
        %v1421 = vld [vmem:[%s1410 + $0x50] sm:$0xff]
        %v1422 = vld [vmem:[%s1410 + $0x58] sm:$0xff]
        %v1423 = vld [vmem:[%s1410 + $0x60] sm:$0xff]
        %v1424 = vld [vmem:[%s1410 + $0x68] sm:$0xff]
        %v1425 = vld [vmem:[%s1410 + $0x70] sm:$0xff]
        %v1426 = vld [vmem:[%s1410 + $0x78] sm:$0xff]
        %s1427 = scalar_lea.vmem %s1, 768
        %v1428 = vld [vmem:[%s1427] sm:$0xff]
        %v1429 = vld [vmem:[%s1427 + $0x8] sm:$0xff]
        %v1430 = vld [vmem:[%s1427 + $0x10] sm:$0xff]
        %v1431 = vld [vmem:[%s1427 + $0x18] sm:$0xff]
        %v1432 = vld [vmem:[%s1427 + $0x20] sm:$0xff]
        %v1433 = vld [vmem:[%s1427 + $0x28] sm:$0xff]
        %v1434 = vld [vmem:[%s1427 + $0x30] sm:$0xff]
        %v1435 = vld [vmem:[%s1427 + $0x38] sm:$0xff]
        %v1436 = vld [vmem:[%s1427 + $0x40] sm:$0xff]
        %v1437 = vld [vmem:[%s1427 + $0x48] sm:$0xff]
        %v1438 = vld [vmem:[%s1427 + $0x50] sm:$0xff]
        %v1439 = vld [vmem:[%s1427 + $0x58] sm:$0xff]
        %v1440 = vld [vmem:[%s1427 + $0x60] sm:$0xff]
        %v1441 = vld [vmem:[%s1427 + $0x68] sm:$0xff]
        %v1442 = vld [vmem:[%s1427 + $0x70] sm:$0xff]
        %v1443 = vld [vmem:[%s1427 + $0x78] sm:$0xff]
        %1444 = vmatpush.msra.mxu0 %v1443
        %1445 = vmatpush.msra.mxu0 %v1442
        %1446 = vmatpush.msra.mxu0 %v1441
        %1447 = vmatpush.msra.mxu0 %v1440
        %1448 = vmatpush.msra.mxu0 %v1439
        %1449 = vmatpush.msra.mxu0 %v1438
        %1450 = vmatpush.msra.mxu0 %v1437
        %1451 = vmatpush.msra.mxu0 %v1436
        %1452 = vmatpush.msra.mxu0 %v1435
        %1453 = vmatpush.msra.mxu0 %v1434
        %1454 = vmatpush.msra.mxu0 %v1433
        %1455 = vmatpush.msra.mxu0 %v1432
        %1456 = vmatpush.msra.mxu0 %v1431
        %1457 = vmatpush.msra.mxu0 %v1430
        %1458 = vmatpush.msra.mxu0 %v1429
        %1459 = vmatpush.msra.mxu0 %v1428
        %1460 = vmatmul.f32.gmra.mxu0 %v1411
        %v1461 = vpop.f32.mrf.mxu0
        %v1462 = vadd.f32 0.0, %v1461
        %1463 = vmatmul.f32.gmra.mxu0 %v1412
        %v1464 = vpop.f32.mrf.mxu0
        %v1465 = vadd.f32 0.0, %v1464
        %1466 = vmatmul.f32.gmra.mxu0 %v1413
        %v1467 = vpop.f32.mrf.mxu0
        %v1468 = vadd.f32 0.0, %v1467
        %1469 = vmatmul.f32.gmra.mxu0 %v1414
        %v1470 = vpop.f32.mrf.mxu0
        %v1471 = vadd.f32 0.0, %v1470
        %1472 = vmatmul.f32.gmra.mxu0 %v1415
        %v1473 = vpop.f32.mrf.mxu0
        %v1474 = vadd.f32 0.0, %v1473
        %1475 = vmatmul.f32.gmra.mxu0 %v1416
        %v1476 = vpop.f32.mrf.mxu0
        %v1477 = vadd.f32 0.0, %v1476
        %1478 = vmatmul.f32.gmra.mxu0 %v1417
        %v1479 = vpop.f32.mrf.mxu0
        %v1480 = vadd.f32 0.0, %v1479
        %1481 = vmatmul.f32.gmra.mxu0 %v1418
        %v1482 = vpop.f32.mrf.mxu0
        %v1483 = vadd.f32 0.0, %v1482
        %1484 = vmatmul.f32.gmra.mxu0 %v1419
        %v1485 = vpop.f32.mrf.mxu0
        %v1486 = vadd.f32 0.0, %v1485
        %1487 = vmatmul.f32.gmra.mxu0 %v1420
        %v1488 = vpop.f32.mrf.mxu0
        %v1489 = vadd.f32 0.0, %v1488
        %1490 = vmatmul.f32.gmra.mxu0 %v1421
        %v1491 = vpop.f32.mrf.mxu0
        %v1492 = vadd.f32 0.0, %v1491
        %1493 = vmatmul.f32.gmra.mxu0 %v1422
        %v1494 = vpop.f32.mrf.mxu0
        %v1495 = vadd.f32 0.0, %v1494
        %1496 = vmatmul.f32.gmra.mxu0 %v1423
        %v1497 = vpop.f32.mrf.mxu0
        %v1498 = vadd.f32 0.0, %v1497
        %1499 = vmatmul.f32.gmra.mxu0 %v1424
        %v1500 = vpop.f32.mrf.mxu0
        %v1501 = vadd.f32 0.0, %v1500
        %1502 = vmatmul.f32.gmra.mxu0 %v1425
        %v1503 = vpop.f32.mrf.mxu0
        %v1504 = vadd.f32 0.0, %v1503
        %1505 = vmatmul.f32.gmra.mxu0 %v1426
        %v1506 = vpop.f32.mrf.mxu0
        %v1507 = vadd.f32 0.0, %v1506
        %1508 = vdwg.mxu0
        %v1509 = vadd.f32 %v1394, %v1462
        %v1510 = vadd.f32 %v1395, %v1465
        %v1511 = vadd.f32 %v1396, %v1468
        %v1512 = vadd.f32 %v1397, %v1471
        %v1513 = vadd.f32 %v1398, %v1474
        %v1514 = vadd.f32 %v1399, %v1477
        %v1515 = vadd.f32 %v1400, %v1480
        %v1516 = vadd.f32 %v1401, %v1483
        %v1517 = vadd.f32 %v1402, %v1486
        %v1518 = vadd.f32 %v1403, %v1489
        %v1519 = vadd.f32 %v1404, %v1492
        %v1520 = vadd.f32 %v1405, %v1495
        %v1521 = vadd.f32 %v1406, %v1498
        %v1522 = vadd.f32 %v1407, %v1501
        %v1523 = vadd.f32 %v1408, %v1504
        %v1524 = vadd.f32 %v1409, %v1507
        %s1525 = scalar_lea.vmem %s728, 896 [#allocation2]
        %v1526 = vld [vmem:[%s1525] sm:$0xff]
        %v1527 = vld [vmem:[%s1525 + $0x8] sm:$0xff]
        %v1528 = vld [vmem:[%s1525 + $0x10] sm:$0xff]
        %v1529 = vld [vmem:[%s1525 + $0x18] sm:$0xff]
        %v1530 = vld [vmem:[%s1525 + $0x20] sm:$0xff]
        %v1531 = vld [vmem:[%s1525 + $0x28] sm:$0xff]
        %v1532 = vld [vmem:[%s1525 + $0x30] sm:$0xff]
        %v1533 = vld [vmem:[%s1525 + $0x38] sm:$0xff]
        %v1534 = vld [vmem:[%s1525 + $0x40] sm:$0xff]
        %v1535 = vld [vmem:[%s1525 + $0x48] sm:$0xff]
        %v1536 = vld [vmem:[%s1525 + $0x50] sm:$0xff]
        %v1537 = vld [vmem:[%s1525 + $0x58] sm:$0xff]
        %v1538 = vld [vmem:[%s1525 + $0x60] sm:$0xff]
        %v1539 = vld [vmem:[%s1525 + $0x68] sm:$0xff]
        %v1540 = vld [vmem:[%s1525 + $0x70] sm:$0xff]
        %v1541 = vld [vmem:[%s1525 + $0x78] sm:$0xff]
        %s1542 = scalar_lea.vmem %s1, 896
        %v1543 = vld [vmem:[%s1542] sm:$0xff]
        %v1544 = vld [vmem:[%s1542 + $0x8] sm:$0xff]
        %v1545 = vld [vmem:[%s1542 + $0x10] sm:$0xff]
        %v1546 = vld [vmem:[%s1542 + $0x18] sm:$0xff]
        %v1547 = vld [vmem:[%s1542 + $0x20] sm:$0xff]
        %v1548 = vld [vmem:[%s1542 + $0x28] sm:$0xff]
        %v1549 = vld [vmem:[%s1542 + $0x30] sm:$0xff]
        %v1550 = vld [vmem:[%s1542 + $0x38] sm:$0xff]
        %v1551 = vld [vmem:[%s1542 + $0x40] sm:$0xff]
        %v1552 = vld [vmem:[%s1542 + $0x48] sm:$0xff]
        %v1553 = vld [vmem:[%s1542 + $0x50] sm:$0xff]
        %v1554 = vld [vmem:[%s1542 + $0x58] sm:$0xff]
        %v1555 = vld [vmem:[%s1542 + $0x60] sm:$0xff]
        %v1556 = vld [vmem:[%s1542 + $0x68] sm:$0xff]
        %v1557 = vld [vmem:[%s1542 + $0x70] sm:$0xff]
        %v1558 = vld [vmem:[%s1542 + $0x78] sm:$0xff]
        %1559 = vmatpush.msra.mxu0 %v1558
        %1560 = vmatpush.msra.mxu0 %v1557
        %1561 = vmatpush.msra.mxu0 %v1556
        %1562 = vmatpush.msra.mxu0 %v1555
        %1563 = vmatpush.msra.mxu0 %v1554
        %1564 = vmatpush.msra.mxu0 %v1553
        %1565 = vmatpush.msra.mxu0 %v1552
        %1566 = vmatpush.msra.mxu0 %v1551
        %1567 = vmatpush.msra.mxu0 %v1550
        %1568 = vmatpush.msra.mxu0 %v1549
        %1569 = vmatpush.msra.mxu0 %v1548
        %1570 = vmatpush.msra.mxu0 %v1547
        %1571 = vmatpush.msra.mxu0 %v1546
        %1572 = vmatpush.msra.mxu0 %v1545
        %1573 = vmatpush.msra.mxu0 %v1544
        %1574 = vmatpush.msra.mxu0 %v1543
        %1575 = vmatmul.f32.gmra.mxu0 %v1526
        %v1576 = vpop.f32.mrf.mxu0
        %v1577 = vadd.f32 0.0, %v1576
        %1578 = vmatmul.f32.gmra.mxu0 %v1527
        %v1579 = vpop.f32.mrf.mxu0
        %v1580 = vadd.f32 0.0, %v1579
        %1581 = vmatmul.f32.gmra.mxu0 %v1528
        %v1582 = vpop.f32.mrf.mxu0
        %v1583 = vadd.f32 0.0, %v1582
        %1584 = vmatmul.f32.gmra.mxu0 %v1529
        %v1585 = vpop.f32.mrf.mxu0
        %v1586 = vadd.f32 0.0, %v1585
        %1587 = vmatmul.f32.gmra.mxu0 %v1530
        %v1588 = vpop.f32.mrf.mxu0
        %v1589 = vadd.f32 0.0, %v1588
        %1590 = vmatmul.f32.gmra.mxu0 %v1531
        %v1591 = vpop.f32.mrf.mxu0
        %v1592 = vadd.f32 0.0, %v1591
        %1593 = vmatmul.f32.gmra.mxu0 %v1532
        %v1594 = vpop.f32.mrf.mxu0
        %v1595 = vadd.f32 0.0, %v1594
        %1596 = vmatmul.f32.gmra.mxu0 %v1533
        %v1597 = vpop.f32.mrf.mxu0
        %v1598 = vadd.f32 0.0, %v1597
        %1599 = vmatmul.f32.gmra.mxu0 %v1534
        %v1600 = vpop.f32.mrf.mxu0
        %v1601 = vadd.f32 0.0, %v1600
        %1602 = vmatmul.f32.gmra.mxu0 %v1535
        %v1603 = vpop.f32.mrf.mxu0
        %v1604 = vadd.f32 0.0, %v1603
        %1605 = vmatmul.f32.gmra.mxu0 %v1536
        %v1606 = vpop.f32.mrf.mxu0
        %v1607 = vadd.f32 0.0, %v1606
        %1608 = vmatmul.f32.gmra.mxu0 %v1537
        %v1609 = vpop.f32.mrf.mxu0
        %v1610 = vadd.f32 0.0, %v1609
        %1611 = vmatmul.f32.gmra.mxu0 %v1538
        %v1612 = vpop.f32.mrf.mxu0
        %v1613 = vadd.f32 0.0, %v1612
        %1614 = vmatmul.f32.gmra.mxu0 %v1539
        %v1615 = vpop.f32.mrf.mxu0
        %v1616 = vadd.f32 0.0, %v1615
        %1617 = vmatmul.f32.gmra.mxu0 %v1540
        %v1618 = vpop.f32.mrf.mxu0
        %v1619 = vadd.f32 0.0, %v1618
        %1620 = vmatmul.f32.gmra.mxu0 %v1541
        %v1621 = vpop.f32.mrf.mxu0
        %v1622 = vadd.f32 0.0, %v1621
        %1623 = vdwg.mxu0
        %v1624 = vadd.f32 %v1509, %v1577
        %v1625 = vadd.f32 %v1510, %v1580
        %v1626 = vadd.f32 %v1511, %v1583
        %v1627 = vadd.f32 %v1512, %v1586
        %v1628 = vadd.f32 %v1513, %v1589
        %v1629 = vadd.f32 %v1514, %v1592
        %v1630 = vadd.f32 %v1515, %v1595
        %v1631 = vadd.f32 %v1516, %v1598
        %v1632 = vadd.f32 %v1517, %v1601
        %v1633 = vadd.f32 %v1518, %v1604
        %v1634 = vadd.f32 %v1519, %v1607
        %v1635 = vadd.f32 %v1520, %v1610
        %v1636 = vadd.f32 %v1521, %v1613
        %v1637 = vadd.f32 %v1522, %v1616
        %v1638 = vadd.f32 %v1523, %v1619
        %v1639 = vadd.f32 %v1524, %v1622
        %s1640 = scalar_lea.vmem %s728, 1024 [#allocation2]
        %v1641 = vld [vmem:[%s1640] sm:$0xff]
        %v1642 = vld [vmem:[%s1640 + $0x8] sm:$0xff]
        %v1643 = vld [vmem:[%s1640 + $0x10] sm:$0xff]
        %v1644 = vld [vmem:[%s1640 + $0x18] sm:$0xff]
        %v1645 = vld [vmem:[%s1640 + $0x20] sm:$0xff]
        %v1646 = vld [vmem:[%s1640 + $0x28] sm:$0xff]
        %v1647 = vld [vmem:[%s1640 + $0x30] sm:$0xff]
        %v1648 = vld [vmem:[%s1640 + $0x38] sm:$0xff]
        %v1649 = vld [vmem:[%s1640 + $0x40] sm:$0xff]
        %v1650 = vld [vmem:[%s1640 + $0x48] sm:$0xff]
        %v1651 = vld [vmem:[%s1640 + $0x50] sm:$0xff]
        %v1652 = vld [vmem:[%s1640 + $0x58] sm:$0xff]
        %v1653 = vld [vmem:[%s1640 + $0x60] sm:$0xff]
        %v1654 = vld [vmem:[%s1640 + $0x68] sm:$0xff]
        %v1655 = vld [vmem:[%s1640 + $0x70] sm:$0xff]
        %v1656 = vld [vmem:[%s1640 + $0x78] sm:$0xff]
        %s1657 = scalar_lea.vmem %s1, 1024
        %v1658 = vld [vmem:[%s1657] sm:$0xff]
        %v1659 = vld [vmem:[%s1657 + $0x8] sm:$0xff]
        %v1660 = vld [vmem:[%s1657 + $0x10] sm:$0xff]
        %v1661 = vld [vmem:[%s1657 + $0x18] sm:$0xff]
        %v1662 = vld [vmem:[%s1657 + $0x20] sm:$0xff]
        %v1663 = vld [vmem:[%s1657 + $0x28] sm:$0xff]
        %v1664 = vld [vmem:[%s1657 + $0x30] sm:$0xff]
        %v1665 = vld [vmem:[%s1657 + $0x38] sm:$0xff]
        %v1666 = vld [vmem:[%s1657 + $0x40] sm:$0xff]
        %v1667 = vld [vmem:[%s1657 + $0x48] sm:$0xff]
        %v1668 = vld [vmem:[%s1657 + $0x50] sm:$0xff]
        %v1669 = vld [vmem:[%s1657 + $0x58] sm:$0xff]
        %v1670 = vld [vmem:[%s1657 + $0x60] sm:$0xff]
        %v1671 = vld [vmem:[%s1657 + $0x68] sm:$0xff]
        %v1672 = vld [vmem:[%s1657 + $0x70] sm:$0xff]
        %v1673 = vld [vmem:[%s1657 + $0x78] sm:$0xff]
        %1674 = vmatpush.msra.mxu0 %v1673
        %1675 = vmatpush.msra.mxu0 %v1672
        %1676 = vmatpush.msra.mxu0 %v1671
        %1677 = vmatpush.msra.mxu0 %v1670
        %1678 = vmatpush.msra.mxu0 %v1669
        %1679 = vmatpush.msra.mxu0 %v1668
        %1680 = vmatpush.msra.mxu0 %v1667
        %1681 = vmatpush.msra.mxu0 %v1666
        %1682 = vmatpush.msra.mxu0 %v1665
        %1683 = vmatpush.msra.mxu0 %v1664
        %1684 = vmatpush.msra.mxu0 %v1663
        %1685 = vmatpush.msra.mxu0 %v1662
        %1686 = vmatpush.msra.mxu0 %v1661
        %1687 = vmatpush.msra.mxu0 %v1660
        %1688 = vmatpush.msra.mxu0 %v1659
        %1689 = vmatpush.msra.mxu0 %v1658
        %1690 = vmatmul.f32.gmra.mxu0 %v1641
        %v1691 = vpop.f32.mrf.mxu0
        %v1692 = vadd.f32 0.0, %v1691
        %1693 = vmatmul.f32.gmra.mxu0 %v1642
        %v1694 = vpop.f32.mrf.mxu0
        %v1695 = vadd.f32 0.0, %v1694
        %1696 = vmatmul.f32.gmra.mxu0 %v1643
        %v1697 = vpop.f32.mrf.mxu0
        %v1698 = vadd.f32 0.0, %v1697
        %1699 = vmatmul.f32.gmra.mxu0 %v1644
        %v1700 = vpop.f32.mrf.mxu0
        %v1701 = vadd.f32 0.0, %v1700
        %1702 = vmatmul.f32.gmra.mxu0 %v1645
        %v1703 = vpop.f32.mrf.mxu0
        %v1704 = vadd.f32 0.0, %v1703
        %1705 = vmatmul.f32.gmra.mxu0 %v1646
        %v1706 = vpop.f32.mrf.mxu0
        %v1707 = vadd.f32 0.0, %v1706
        %1708 = vmatmul.f32.gmra.mxu0 %v1647
        %v1709 = vpop.f32.mrf.mxu0
        %v1710 = vadd.f32 0.0, %v1709
        %1711 = vmatmul.f32.gmra.mxu0 %v1648
        %v1712 = vpop.f32.mrf.mxu0
        %v1713 = vadd.f32 0.0, %v1712
        %1714 = vmatmul.f32.gmra.mxu0 %v1649
        %v1715 = vpop.f32.mrf.mxu0
        %v1716 = vadd.f32 0.0, %v1715
        %1717 = vmatmul.f32.gmra.mxu0 %v1650
        %v1718 = vpop.f32.mrf.mxu0
        %v1719 = vadd.f32 0.0, %v1718
        %1720 = vmatmul.f32.gmra.mxu0 %v1651
        %v1721 = vpop.f32.mrf.mxu0
        %v1722 = vadd.f32 0.0, %v1721
        %1723 = vmatmul.f32.gmra.mxu0 %v1652
        %v1724 = vpop.f32.mrf.mxu0
        %v1725 = vadd.f32 0.0, %v1724
        %1726 = vmatmul.f32.gmra.mxu0 %v1653
        %v1727 = vpop.f32.mrf.mxu0
        %v1728 = vadd.f32 0.0, %v1727
        %1729 = vmatmul.f32.gmra.mxu0 %v1654
        %v1730 = vpop.f32.mrf.mxu0
        %v1731 = vadd.f32 0.0, %v1730
        %1732 = vmatmul.f32.gmra.mxu0 %v1655
        %v1733 = vpop.f32.mrf.mxu0
        %v1734 = vadd.f32 0.0, %v1733
        %1735 = vmatmul.f32.gmra.mxu0 %v1656
        %v1736 = vpop.f32.mrf.mxu0
        %v1737 = vadd.f32 0.0, %v1736
        %1738 = vdwg.mxu0
        %v1739 = vadd.f32 %v1624, %v1692
        %v1740 = vadd.f32 %v1625, %v1695
        %v1741 = vadd.f32 %v1626, %v1698
        %v1742 = vadd.f32 %v1627, %v1701
        %v1743 = vadd.f32 %v1628, %v1704
        %v1744 = vadd.f32 %v1629, %v1707
        %v1745 = vadd.f32 %v1630, %v1710
        %v1746 = vadd.f32 %v1631, %v1713
        %v1747 = vadd.f32 %v1632, %v1716
        %v1748 = vadd.f32 %v1633, %v1719
        %v1749 = vadd.f32 %v1634, %v1722
        %v1750 = vadd.f32 %v1635, %v1725
        %v1751 = vadd.f32 %v1636, %v1728
        %v1752 = vadd.f32 %v1637, %v1731
        %v1753 = vadd.f32 %v1638, %v1734
        %v1754 = vadd.f32 %v1639, %v1737
        %1755 = vst [vmem:[%s752] sm:$0xff] %v1739
        %1756 = vst [vmem:[%s752 + $0x8] sm:$0xff] %v1740
        %1757 = vst [vmem:[%s752 + $0x10] sm:$0xff] %v1741
        %1758 = vst [vmem:[%s752 + $0x18] sm:$0xff] %v1742
        %1759 = vst [vmem:[%s752 + $0x20] sm:$0xff] %v1743
        %1760 = vst [vmem:[%s752 + $0x28] sm:$0xff] %v1744
        %1761 = vst [vmem:[%s752 + $0x30] sm:$0xff] %v1745
        %1762 = vst [vmem:[%s752 + $0x38] sm:$0xff] %v1746
        %1763 = vst [vmem:[%s752 + $0x40] sm:$0xff] %v1747
        %1764 = vst [vmem:[%s752 + $0x48] sm:$0xff] %v1748
        %1765 = vst [vmem:[%s752 + $0x50] sm:$0xff] %v1749
        %1766 = vst [vmem:[%s752 + $0x58] sm:$0xff] %v1750
        %1767 = vst [vmem:[%s752 + $0x60] sm:$0xff] %v1751
        %1768 = vst [vmem:[%s752 + $0x68] sm:$0xff] %v1752
        %1769 = vst [vmem:[%s752 + $0x70] sm:$0xff] %v1753
        %1770 = vst [vmem:[%s752 + $0x78] sm:$0xff] %v1754
        %s1771 = smul.u32 16, %s13
        %p1772 = scmp.lt.s32.totalorder %s1771, 31
        %s1773 = scalar_select %p1772, %s1771, 31
        %s1774 = smul.addr %s1773, 8
        %s1775 = scalar_lea.vmem %s2, %s1774
        // Predicated region
        $region67: #{basic_conv3d.1} parent=61 // pred_check
          %p1776 = pneg %p78
        $region68: #{basic_conv3d.1} parent=61 // pred_check_branch
          %1778 = sbr.rel (%p1776) target = $region70
        $region69: #{basic_conv3d.1} parent=61 // pred_region
          %s1779 = smul.u32 16, %s13
        $region70: #{basic_conv3d.1} parent=61 // pred_fallthru
          _
      $region62: #{basic_conv3d.1} parent=5 // pred_fallthru
        _
      %p1780 = scmp.le.s32.totalorder 2, %s8
      // Predicated region
      $region71: #{basic_conv3d.1} parent=5 // pred_check
        %p1781 = pneg %p1780
      $region72: #{basic_conv3d.1} parent=5 // pred_check_branch
        %1783 = sbr.rel (%p1781) target = $region74
      $region73: #{basic_conv3d.1} parent=5 // pred_region
        %s1784 = ssub.s32 %s8, 2
        // Predicated region
        $region75: #{basic_conv3d.1} parent=73 // pred_check
          %p1785 = pneg %p84
        $region76: #{basic_conv3d.1} parent=73 // pred_check_branch
          %1787 = sbr.rel (%p1785) target = $region78
        $region77: #{basic_conv3d.1} parent=73 // pred_region
          %s1788 = smul.u32 16, %s14
          %p1789 = scmp.lt.s32.totalorder %s1788, 31
          %s1790 = scalar_select %p1789, %s1788, 31
          %s1791 = smul.addr %s1790, 8
          %s1792 = scalar_lea.vmem %s2, %s1791
        $region78: #{basic_conv3d.1} parent=73 // pred_fallthru
          _
      $region74: #{basic_conv3d.1} parent=5 // pred_fallthru
        _
    $region6: #{basic_conv3d.1} parent=1 // loop_footer
      %s12 = sadd.s32 1, %s8
    $region7: #{basic_conv3d.1} parent=1 // loop_footer_branch
      %7 = sbr.rel target = $region3
    $region8: #{basic_conv3d.1} parent=1 // loop_exit
      _

</llo_original>
